<compile_context>
chip_gen: v6e
topology: v6e:2x2x1
jax: 0.10.0
libtpu: 0.0.40
codegen_flags: <defaults>
</compile_context>

<pallas_src>
import jax
import jax.numpy as jnp
import numpy as np
from jax import lax
from jax.experimental import pallas as pl
from jax.experimental.pallas import tpu as pltpu

EPS = 1e-12  # assumed config.layer_norm_eps


def _vit_intermediate_kernel(x_ref, w_ref, p_ref, o_ref):
    # x_ref: (TN, D)   token tile
    # w_ref: (D, I)    dense weight, transposed so y = x @ w
    # p_ref: (5, I)    rows: [fused_bias, ln_gamma, ln_beta - move1, prelu_alpha, move2]
    # o_ref: (TN, I)
    d = x_ref.shape[1]
    i_dim = w_ref.shape[1]
    ratio = i_dim // d

    x = x_ref[...]  # (TN, D) f32

    # dense(x + move): move folded into the fused bias (row 0) in the wrapper.
    y = jnp.dot(x, w_ref[...], preferred_element_type=jnp.float32) + p_ref[0]

    # LayerNorm over the intermediate (lane) dim (two-pass, matches reference).
    mu = jnp.mean(y, axis=-1, keepdims=True)
    var = jnp.mean((y - mu) ** 2, axis=-1, keepdims=True)
    y = (y - mu) * lax.rsqrt(var + EPS)

    # affine (beta already has -move1 folded in) + residual concat of x.
    v = y * p_ref[1] + p_ref[2] + jnp.tile(x, (1, ratio))

    # RPReLU: per-feature PReLU, then + move2.
    o_ref[...] = jnp.where(v >= 0.0, v, p_ref[3] * v) + p_ref[4]


def _choose_tile(m, d, i):
    """Largest token tile whose pipelined VMEM footprint stays in budget."""
    budget = 26 * 1024 * 1024
    fixed = 2 * 4 * (d * i + 8 * i)  # resident weight + packed params (x2 buffers)
    if m <= 128:
        return 8 * ((m + 7) // 8)
    for t in (1024, 512, 256, 128):
        if t <= m and fixed + 2 * 4 * t * (d + i) <= budget:
            return t
    return 128


@jax.jit
def vit_intermediate(x, params):
    """x: (B, N, D) hidden states. Returns (B, N, I) with I = ratio * D."""
    B, N, D = x.shape
    W = params["dense_w"].astype(jnp.float32)  # (I, D)  torch Linear weight
    b = params["dense_b"].astype(jnp.float32)  # (I,)
    I = W.shape[0]
    assert I % D == 0, "intermediate_size must be a multiple of hidden_size"

    wT = W.T  # (D, I); tiny one-time transpose of the parameter, not activations
    move = params["move"].astype(jnp.float32)
    b_eff = b + move @ wT                                  # fold `move` into bias
    beta_eff = (params["norm_b"].astype(jnp.float32)
                - params["move1"].astype(jnp.float32))     # fold move1 into beta

    pmat = jnp.stack(
        [
            b_eff,
            params["norm_w"].astype(jnp.float32),
            beta_eff,
            params["prelu_alpha"].astype(jnp.float32),
            params["move2"].astype(jnp.float32),
        ],
        axis=0,
    )  # (5, I)

    M = B * N
    x2 = x.reshape(M, D).astype(jnp.float32)  # free reshape, no transpose

    TN = _choose_tile(M, D, I)
    M_pad = TN * ((M + TN - 1) // TN)
    if M_pad != M:
        x2 = jnp.pad(x2, ((0, M_pad - M), (0, 0)))

    out = pl.pallas_call(
        _vit_intermediate_kernel,
        out_shape=jax.ShapeDtypeStruct((M_pad, I), jnp.float32),
        grid_spec=pltpu.PrefetchScalarGridSpec(
            num_scalar_prefetch=0,
            grid=(M_pad // TN,),
            in_specs=[
                pl.BlockSpec((TN, D), lambda i: (i, 0)),   # token tile
                pl.BlockSpec((D, I), lambda i: (0, 0)),    # weight (resident)
                pl.BlockSpec((5, I), lambda i: (0, 0)),    # packed per-feature params
            ],
            out_specs=pl.BlockSpec((TN, I), lambda i: (i, 0)),
        ),
        compiler_params=pltpu.CompilerParams(
            dimension_semantics=("parallel",),
            vmem_limit_bytes=32 * 1024 * 1024,
        ),
    )(x2, wT, pmat)

    if M_pad != M:
        out = out[:M]
    return out.reshape(B, N, I)


def reference(x, params):
    """Plain-JAX literal replica of the PyTorch forward (for validation)."""
    D = x.shape[-1]
    I = params["dense_w"].shape[0]
    ratio = I // D
    h = x + params["move"]
    y = h @ params["dense_w"].T + params["dense_b"]
    mu = jnp.mean(y, axis=-1, keepdims=True)
    var = jnp.mean((y - mu) ** 2, axis=-1, keepdims=True)
    y = (y - mu) / jnp.sqrt(var + EPS) * params["norm_w"] + params["norm_b"]
    y = y + jnp.concatenate([x] * ratio, axis=-1)
    v = y - params["move1"]
    y = jnp.where(v >= 0.0, v, params["prelu_alpha"] * v) + params["move2"]
    return y


if __name__ == "__main__":
    B, N, D = 2, 256, 32        # batch, tokens, hidden_size
    RATIO = 4
    I = RATIO * D               # intermediate_size = 128 (lane-dense)

    key = jax.random.PRNGKey(0)
    ks = jax.random.split(key, 9)
    x = jax.random.normal(ks[0], (B, N, D), jnp.float32)

    params = {
        "move": 0.05 * jax.random.normal(ks[1], (D,), jnp.float32),
        "dense_w": 0.1 * jax.random.normal(ks[2], (I, D), jnp.float32),
        "dense_b": 0.05 * jax.random.normal(ks[3], (I,), jnp.float32),
        "norm_w": 1.0 + 0.1 * jax.random.normal(ks[4], (I,), jnp.float32),
        "norm_b": 0.1 * jax.random.normal(ks[5], (I,), jnp.float32),
        "prelu_alpha": 0.25 + 0.05 * jax.random.normal(ks[6], (I,), jnp.float32),
        "move1": 0.05 * jax.random.normal(ks[7], (I,), jnp.float32),
        "move2": 0.05 * jax.random.normal(ks[8], (I,), jnp.float32),
    }

    out = jax.block_until_ready(vit_intermediate(x, params))
    assert out.shape == (B, N, I), out.shape

    ref = jax.block_until_ready(reference(x, params))
    np.testing.assert_allclose(np.asarray(out), np.asarray(ref),
                               rtol=1e-5, atol=1e-5)
    print("KERNEL_OK")
</pallas_src>

<mosaic_0001>
module attributes {stable_mosaic.version = 11 : i64} {
  func.func @_vit_intermediate_kernel(%arg0: i32, %arg1: memref<512x32xf32, #tpu.memory_space<vmem>>, %arg2: memref<32x128xf32, #tpu.memory_space<vmem>>, %arg3: memref<5x128xf32, #tpu.memory_space<vmem>>, %arg4: memref<512x128xf32, #tpu.memory_space<vmem>>) attributes {dimension_semantics = [#tpu.dimension_semantics<parallel>], iteration_bounds = array<i64: 1>, scalar_prefetch = 0 : i64, scratch_operands = 0 : i64, tpu.core_type = #tpu.core_type<tc>, window_params = [{transform_indices = @transform_0, window_bounds = array<i64: 512, 32>}, {pipeline_mode = #tpu.pipeline_mode<synchronous>, transform_indices = @transform_1, window_bounds = array<i64: 32, 128>}, {pipeline_mode = #tpu.pipeline_mode<synchronous>, transform_indices = @transform_2, window_bounds = array<i64: 5, 128>}, {transform_indices = @transform_3, window_bounds = array<i64: 512, 128>}]} {
    %c0 = arith.constant 0 : index
    %c0_0 = arith.constant 0 : index
    %0 = vector.load %arg1[%c0, %c0_0] : memref<512x32xf32, #tpu.memory_space<vmem>>, vector<512x32xf32>
    %c0_1 = arith.constant 0 : index
    %c0_2 = arith.constant 0 : index
    %1 = vector.load %arg2[%c0_1, %c0_2] : memref<32x128xf32, #tpu.memory_space<vmem>>, vector<32x128xf32>
    %cst = arith.constant dense<0.000000e+00> : vector<512x128xf32>
    %2 = tpu.matmul %0, %1, %cst {dimension_numbers = #tpu.dot_dimension_numbers<[1], [0], [0], [1], [0, 0, 1, 1], [], []>} : vector<512x32xf32>, vector<32x128xf32>, vector<512x128xf32> -> vector<512x128xf32>
    %c0_3 = arith.constant 0 : index
    %c0_4 = arith.constant 0 : index
    %3 = vector.load %arg3[%c0_3, %c0_4] : memref<5x128xf32, #tpu.memory_space<vmem>>, vector<1x128xf32>
    %4 = vector.shape_cast %3 : vector<1x128xf32> to vector<128xf32>
    %5 = vector.shape_cast %4 : vector<128xf32> to vector<1x128xf32>
    %6 = vector.broadcast %5 : vector<1x128xf32> to vector<512x128xf32>
    %7 = arith.addf %2, %6 : vector<512x128xf32>
    %cst_5 = arith.constant dense<0.000000e+00> : vector<512xf32>
    %8 = vector.multi_reduction <add>, %7, %cst_5 [1] : vector<512x128xf32> to vector<512xf32>
    %9 = vector.shape_cast %8 : vector<512xf32> to vector<512x1xf32>
    %cst_6 = arith.constant 1.280000e+02 : f32
    %10 = vector.broadcast %cst_6 : f32 to vector<512x1xf32>
    %11 = arith.divf %9, %10 : vector<512x1xf32>
    %12 = vector.broadcast %11 : vector<512x1xf32> to vector<512x128xf32>
    %13 = arith.subf %7, %12 : vector<512x128xf32>
    %14 = arith.mulf %13, %13 : vector<512x128xf32>
    %cst_7 = arith.constant dense<0.000000e+00> : vector<512xf32>
    %15 = vector.multi_reduction <add>, %14, %cst_7 [1] : vector<512x128xf32> to vector<512xf32>
    %16 = vector.shape_cast %15 : vector<512xf32> to vector<512x1xf32>
    %cst_8 = arith.constant 1.280000e+02 : f32
    %17 = vector.broadcast %cst_8 : f32 to vector<512x1xf32>
    %18 = arith.divf %16, %17 : vector<512x1xf32>
    %19 = vector.broadcast %11 : vector<512x1xf32> to vector<512x128xf32>
    %20 = arith.subf %7, %19 : vector<512x128xf32>
    %cst_9 = arith.constant 9.99999996E-13 : f32
    %21 = vector.broadcast %cst_9 : f32 to vector<512x1xf32>
    %22 = arith.addf %18, %21 : vector<512x1xf32>
    %23 = math.rsqrt %22 : vector<512x1xf32>
    %24 = vector.broadcast %23 : vector<512x1xf32> to vector<512x128xf32>
    %25 = arith.mulf %20, %24 : vector<512x128xf32>
    %c1 = arith.constant 1 : index
    %c0_10 = arith.constant 0 : index
    %26 = vector.load %arg3[%c1, %c0_10] : memref<5x128xf32, #tpu.memory_space<vmem>>, vector<1x128xf32>
    %27 = vector.shape_cast %26 : vector<1x128xf32> to vector<128xf32>
    %28 = vector.shape_cast %27 : vector<128xf32> to vector<1x128xf32>
    %29 = vector.broadcast %28 : vector<1x128xf32> to vector<512x128xf32>
    %30 = arith.mulf %25, %29 : vector<512x128xf32>
    %c2 = arith.constant 2 : index
    %c0_11 = arith.constant 0 : index
    %31 = vector.load %arg3[%c2, %c0_11] : memref<5x128xf32, #tpu.memory_space<vmem>>, vector<1x128xf32>
    %32 = vector.shape_cast %31 : vector<1x128xf32> to vector<128xf32>
    %33 = vector.shape_cast %32 : vector<128xf32> to vector<1x128xf32>
    %34 = vector.broadcast %33 : vector<1x128xf32> to vector<512x128xf32>
    %35 = arith.addf %30, %34 : vector<512x128xf32>
    %36 = tpu.concatenate %0, %0, %0, %0 in 1 : vector<512x32xf32>, vector<512x32xf32>, vector<512x32xf32>, vector<512x32xf32> -> vector<512x128xf32>
    %37 = arith.addf %35, %36 : vector<512x128xf32>
    %cst_12 = arith.constant 0.000000e+00 : f32
    %38 = vector.broadcast %cst_12 : f32 to vector<512x128xf32>
    %39 = arith.cmpf oge, %37, %38 : vector<512x128xf32>
    %c3 = arith.constant 3 : index
    %c0_13 = arith.constant 0 : index
    %40 = vector.load %arg3[%c3, %c0_13] : memref<5x128xf32, #tpu.memory_space<vmem>>, vector<1x128xf32>
    %41 = vector.shape_cast %40 : vector<1x128xf32> to vector<128xf32>
    %42 = vector.shape_cast %41 : vector<128xf32> to vector<1x128xf32>
    %43 = vector.broadcast %42 : vector<1x128xf32> to vector<512x128xf32>
    %44 = arith.mulf %43, %37 : vector<512x128xf32>
    %45 = arith.select %39, %37, %44 : vector<512x128xi1>, vector<512x128xf32>
    %c4 = arith.constant 4 : index
    %c0_14 = arith.constant 0 : index
    %46 = vector.load %arg3[%c4, %c0_14] : memref<5x128xf32, #tpu.memory_space<vmem>>, vector<1x128xf32>
    %47 = vector.shape_cast %46 : vector<1x128xf32> to vector<128xf32>
    %48 = vector.shape_cast %47 : vector<128xf32> to vector<1x128xf32>
    %49 = vector.broadcast %48 : vector<1x128xf32> to vector<512x128xf32>
    %50 = arith.addf %45, %49 : vector<512x128xf32>
    %c0_15 = arith.constant 0 : index
    %c0_16 = arith.constant 0 : index
    %51 = vector.load %arg4[%c0_15, %c0_16] : memref<512x128xf32, #tpu.memory_space<vmem>>, vector<512x128xf32>
    tpu.vector_store %arg4[%c0_15, %c0_16], %50 {strides = array<i32>} : memref<512x128xf32, #tpu.memory_space<vmem>>, vector<512x128xf32>,
    return
  }
  func.func @transform_0(%arg0: i32) -> (i32, i32) {
    %c0_i32 = arith.constant 0 : i32
    %c0_i32_0 = arith.constant 0 : i32
    return %arg0, %c0_i32 : i32, i32
  }
  func.func @transform_1(%arg0: i32) -> (i32, i32) {
    %c0_i32 = arith.constant 0 : i32
    %c0_i32_0 = arith.constant 0 : i32
    %c0_i32_1 = arith.constant 0 : i32
    return %c0_i32, %c0_i32_0 : i32, i32
  }
  func.func @transform_2(%arg0: i32) -> (i32, i32) {
    %c0_i32 = arith.constant 0 : i32
    %c0_i32_0 = arith.constant 0 : i32
    %c0_i32_1 = arith.constant 0 : i32
    return %c0_i32, %c0_i32_0 : i32, i32
  }
  func.func @transform_3(%arg0: i32) -> (i32, i32) {
    %c0_i32 = arith.constant 0 : i32
    %c0_i32_0 = arith.constant 0 : i32
    return %arg0, %c0_i32 : i32, i32
  }
}

</mosaic_0001>

<llo_original>
// kernel: vit_intermediate.1
$region0: #{vit_intermediate.1}
  #allocation0 [shape = 'u32[]', space=smem, size = 0x4, offset = 0x4, fixed_abs, tag = 'smem constant byte address 0x4 - core index']
  #allocation1 [shape = 'u32[144,128]{1,0:T(1,128)}', space=vmem, size = 0x12000, scoped, tag = 'internal scratch']
  %s0 = inlined_call_operand.vmem [shape: f32[512,32], index: 0, kind: input, shape index: {}]
  %s1 = inlined_call_operand.vmem [shape: f32[32,128], index: 1, kind: input, shape index: {}]
  %s2 = inlined_call_operand.vmem [shape: f32[5,128], index: 2, kind: input, shape index: {}]
  %s3 = inlined_call_operand.hbm [shape: f32[512,128], index: 3, kind: output, shape index: {}]
  %s4 = sld [smem:[#allocation0]]
  $region22: #{vit_intermediate.1} parent=0
    _
  %s6 = ssub.s32 1, %s4
  %s7 = scalar_select 0, %s6, %s4
  $region1: #{vit_intermediate.1} parent=0
    #allocation2 [shape = 'u8[262144]{0}', space=vmem, size = 0x40000, scoped, tag = 'output window, operand 0, single buffered']
    #allocation3 [shape = 's32[1]{0}', space=sflag, size = 0x4, scoped, tag = 'scoped memory for vit_intermediate.1']
    %8 = vsyncpa [#allocation3], 0
    // Predicated region
    $region2: #{vit_intermediate.1} parent=1 // pred_check
      _
    $region3: #{vit_intermediate.1} parent=1 // pred_check_branch
      %10 = sbr.rel (0) target = $region5
    $region4: #{vit_intermediate.1} parent=1 // pred_region
      _
    $region5: #{vit_intermediate.1} parent=1 // pred_fallthru
      _
    // Predicated region
    $region6: #{vit_intermediate.1} parent=1 // pred_check
      _
    $region7: #{vit_intermediate.1} parent=1 // pred_check_branch
      %12 = sbr.rel (0) target = $region9
    $region8: #{vit_intermediate.1} parent=1 // pred_region
      _
    $region9: #{vit_intermediate.1} parent=1 // pred_fallthru
      _
    // Predicated region
    $region10: #{vit_intermediate.1} parent=1 // pred_check
      _
    $region11: #{vit_intermediate.1} parent=1 // pred_check_branch
      %14 = sbr.rel (0) target = $region13
    $region12: #{vit_intermediate.1} parent=1 // pred_region
      _
    $region13: #{vit_intermediate.1} parent=1 // pred_fallthru
      _
    %v15 = vld [vmem:[%s0] sm:$0xff]
    %v16 = vld [vmem:[%s0 + $0x8] sm:$0xff]
    %v17 = vld [vmem:[%s0 + $0x10] sm:$0xff]
    %v18 = vld [vmem:[%s0 + $0x18] sm:$0xff]
    %v19 = vld [vmem:[%s0 + $0x20] sm:$0xff]
    %v20 = vld [vmem:[%s0 + $0x28] sm:$0xff]
    %v21 = vld [vmem:[%s0 + $0x30] sm:$0xff]
    %v22 = vld [vmem:[%s0 + $0x38] sm:$0xff]
    %v23 = vld [vmem:[%s0 + $0x40] sm:$0xff]
    %v24 = vld [vmem:[%s0 + $0x48] sm:$0xff]
    %v25 = vld [vmem:[%s0 + $0x50] sm:$0xff]
    %v26 = vld [vmem:[%s0 + $0x58] sm:$0xff]
    %v27 = vld [vmem:[%s0 + $0x60] sm:$0xff]
    %v28 = vld [vmem:[%s0 + $0x68] sm:$0xff]
    %v29 = vld [vmem:[%s0 + $0x70] sm:$0xff]
    %v30 = vld [vmem:[%s0 + $0x78] sm:$0xff]
    %v31 = vld [vmem:[%s0 + $0x80] sm:$0xff]
    %v32 = vld [vmem:[%s0 + $0x88] sm:$0xff]
    %v33 = vld [vmem:[%s0 + $0x90] sm:$0xff]
    %v34 = vld [vmem:[%s0 + $0x98] sm:$0xff]
    %v35 = vld [vmem:[%s0 + $0xa0] sm:$0xff]
    %v36 = vld [vmem:[%s0 + $0xa8] sm:$0xff]
    %v37 = vld [vmem:[%s0 + $0xb0] sm:$0xff]
    %v38 = vld [vmem:[%s0 + $0xb8] sm:$0xff]
    %v39 = vld [vmem:[%s0 + $0xc0] sm:$0xff]
    %v40 = vld [vmem:[%s0 + $0xc8] sm:$0xff]
    %v41 = vld [vmem:[%s0 + $0xd0] sm:$0xff]
    %v42 = vld [vmem:[%s0 + $0xd8] sm:$0xff]
    %v43 = vld [vmem:[%s0 + $0xe0] sm:$0xff]
    %v44 = vld [vmem:[%s0 + $0xe8] sm:$0xff]
    %v45 = vld [vmem:[%s0 + $0xf0] sm:$0xff]
    %v46 = vld [vmem:[%s0 + $0xf8] sm:$0xff]
    %v47 = vld [vmem:[%s0 + $0x100] sm:$0xff]
    %v48 = vld [vmem:[%s0 + $0x108] sm:$0xff]
    %v49 = vld [vmem:[%s0 + $0x110] sm:$0xff]
    %v50 = vld [vmem:[%s0 + $0x118] sm:$0xff]
    %v51 = vld [vmem:[%s0 + $0x120] sm:$0xff]
    %v52 = vld [vmem:[%s0 + $0x128] sm:$0xff]
    %v53 = vld [vmem:[%s0 + $0x130] sm:$0xff]
    %v54 = vld [vmem:[%s0 + $0x138] sm:$0xff]
    %v55 = vld [vmem:[%s0 + $0x140] sm:$0xff]
    %v56 = vld [vmem:[%s0 + $0x148] sm:$0xff]
    %v57 = vld [vmem:[%s0 + $0x150] sm:$0xff]
    %v58 = vld [vmem:[%s0 + $0x158] sm:$0xff]
    %v59 = vld [vmem:[%s0 + $0x160] sm:$0xff]
    %v60 = vld [vmem:[%s0 + $0x168] sm:$0xff]
    %v61 = vld [vmem:[%s0 + $0x170] sm:$0xff]
    %v62 = vld [vmem:[%s0 + $0x178] sm:$0xff]
    %v63 = vld [vmem:[%s0 + $0x180] sm:$0xff]
    %v64 = vld [vmem:[%s0 + $0x188] sm:$0xff]
    %v65 = vld [vmem:[%s0 + $0x190] sm:$0xff]
    %v66 = vld [vmem:[%s0 + $0x198] sm:$0xff]
    %v67 = vld [vmem:[%s0 + $0x1a0] sm:$0xff]
    %v68 = vld [vmem:[%s0 + $0x1a8] sm:$0xff]
    %v69 = vld [vmem:[%s0 + $0x1b0] sm:$0xff]
    %v70 = vld [vmem:[%s0 + $0x1b8] sm:$0xff]
    %v71 = vld [vmem:[%s0 + $0x1c0] sm:$0xff]
    %v72 = vld [vmem:[%s0 + $0x1c8] sm:$0xff]
    %v73 = vld [vmem:[%s0 + $0x1d0] sm:$0xff]
    %v74 = vld [vmem:[%s0 + $0x1d8] sm:$0xff]
    %v75 = vld [vmem:[%s0 + $0x1e0] sm:$0xff]
    %v76 = vld [vmem:[%s0 + $0x1e8] sm:$0xff]
    %v77 = vld [vmem:[%s0 + $0x1f0] sm:$0xff]
    %v78 = vld [vmem:[%s0 + $0x1f8] sm:$0xff]
    %v79 = vld [vmem:[%s1] sm:$0xff]
    %v80 = vld [vmem:[%s1 + $0x8] sm:$0xff]
    %v81 = vld [vmem:[%s1 + $0x10] sm:$0xff]
    %v82 = vld [vmem:[%s1 + $0x18] sm:$0xff]
    %v83 = vld [vmem:[%s2] sm:$0x1]
    %v84 = vlaneseq
    %v85 = vshrl.u32 %v84, 7
    %v86 = vsub.s32 0, %v85
    %v87 = vrot.slane %v83, %v86
    %vm88 = vcmask 261120
    %v90 = vsel %vm88, %v15, 0
    %v93 = vsel %vm88, %v16, 0
    %v96 = vsel %vm88, %v17, 0
    %v99 = vsel %vm88, %v18, 0
    %v102 = vsel %vm88, %v19, 0
    %v105 = vsel %vm88, %v20, 0
    %v108 = vsel %vm88, %v21, 0
    %v111 = vsel %vm88, %v22, 0
    %v114 = vsel %vm88, %v23, 0
    %v117 = vsel %vm88, %v24, 0
    %v120 = vsel %vm88, %v25, 0
    %v123 = vsel %vm88, %v26, 0
    %v126 = vsel %vm88, %v27, 0
    %v129 = vsel %vm88, %v28, 0
    %v132 = vsel %vm88, %v29, 0
    %v135 = vsel %vm88, %v30, 0
    %v138 = vsel %vm88, %v31, 0
    %v141 = vsel %vm88, %v32, 0
    %v144 = vsel %vm88, %v33, 0
    %v147 = vsel %vm88, %v34, 0
    %v150 = vsel %vm88, %v35, 0
    %v153 = vsel %vm88, %v36, 0
    %v156 = vsel %vm88, %v37, 0
    %v159 = vsel %vm88, %v38, 0
    %v162 = vsel %vm88, %v39, 0
    %v165 = vsel %vm88, %v40, 0
    %v168 = vsel %vm88, %v41, 0
    %v171 = vsel %vm88, %v42, 0
    %v174 = vsel %vm88, %v43, 0
    %v177 = vsel %vm88, %v44, 0
    %v180 = vsel %vm88, %v45, 0
    %v183 = vsel %vm88, %v46, 0
    %v186 = vsel %vm88, %v47, 0
    %v189 = vsel %vm88, %v48, 0
    %v192 = vsel %vm88, %v49, 0
    %v195 = vsel %vm88, %v50, 0
    %v198 = vsel %vm88, %v51, 0
    %v201 = vsel %vm88, %v52, 0
    %v204 = vsel %vm88, %v53, 0
    %v207 = vsel %vm88, %v54, 0
    %v210 = vsel %vm88, %v55, 0
    %v213 = vsel %vm88, %v56, 0
    %v216 = vsel %vm88, %v57, 0
    %v219 = vsel %vm88, %v58, 0
    %v222 = vsel %vm88, %v59, 0
    %v225 = vsel %vm88, %v60, 0
    %v228 = vsel %vm88, %v61, 0
    %v231 = vsel %vm88, %v62, 0
    %v234 = vsel %vm88, %v63, 0
    %v237 = vsel %vm88, %v64, 0
    %v240 = vsel %vm88, %v65, 0
    %v243 = vsel %vm88, %v66, 0
    %v246 = vsel %vm88, %v67, 0
    %v249 = vsel %vm88, %v68, 0
    %v252 = vsel %vm88, %v69, 0
    %v255 = vsel %vm88, %v70, 0
    %v258 = vsel %vm88, %v71, 0
    %v261 = vsel %vm88, %v72, 0
    %v264 = vsel %vm88, %v73, 0
    %v267 = vsel %vm88, %v74, 0
    %v270 = vsel %vm88, %v75, 0
    %v273 = vsel %vm88, %v76, 0
    %v276 = vsel %vm88, %v77, 0
    %v279 = vsel %vm88, %v78, 0
    %281 = vmatprep.subr.mxu0 0.0
    %282 = vmatpush1.msra.mxu0 0.0
    %283 = vmatprep.subr.mxu0 0.0
    %284 = vmatpush1.msra.mxu0 0.0
    %285 = vmatprep.subr.mxu0 0.0
    %286 = vmatpush1.msra.mxu0 0.0
    %287 = vmatprep.subr.mxu0 0.0
    %288 = vmatpush1.msra.mxu0 0.0
    %289 = vmatprep.subr.mxu0 0.0
    %290 = vmatpush1.msra.mxu0 0.0
    %291 = vmatprep.subr.mxu0 0.0
    %292 = vmatpush1.msra.mxu0 0.0
    %293 = vmatprep.subr.mxu0 0.0
    %294 = vmatpush1.msra.mxu0 0.0
    %295 = vmatprep.subr.mxu0 0.0
    %296 = vmatpush1.msra.mxu0 0.0
    %297 = vmatprep.subr.mxu0 0.0
    %298 = vmatpush1.msra.mxu0 0.0
    %299 = vmatprep.subr.mxu0 0.0
    %300 = vmatpush1.msra.mxu0 0.0
    %301 = vmatprep.subr.mxu0 0.0
    %302 = vmatpush1.msra.mxu0 0.0
    %303 = vmatprep.subr.mxu0 0.0
    %304 = vmatpush1.msra.mxu0 0.0
    %305 = vmatprep.subr.mxu0 0.0
    %306 = vmatpush1.msra.mxu0 %v82
    %307 = vmatprep.subr.mxu0 0.0
    %308 = vmatpush1.msra.mxu0 %v81
    %309 = vmatprep.subr.mxu0 0.0
    %310 = vmatpush1.msra.mxu0 %v80
    %311 = vmatprep.subr.mxu0 0.0
    %312 = vmatpush1.msra.mxu0 %v79
    %313 = vmatprep.subr.mxu0 0.0
    %314 = vmatpush2.msra.mxu0 0.0
    %315 = vmatprep.subr.mxu0 0.0
    %316 = vmatpush2.msra.mxu0 0.0
    %317 = vmatprep.subr.mxu0 0.0
    %318 = vmatpush2.msra.mxu0 0.0
    %319 = vmatprep.subr.mxu0 0.0
    %320 = vmatpush2.msra.mxu0 0.0
    %321 = vmatprep.subr.mxu0 0.0
    %322 = vmatpush2.msra.mxu0 0.0
    %323 = vmatprep.subr.mxu0 0.0
    %324 = vmatpush2.msra.mxu0 0.0
    %325 = vmatprep.subr.mxu0 0.0
    %326 = vmatpush2.msra.mxu0 0.0
    %327 = vmatprep.subr.mxu0 0.0
    %328 = vmatpush2.msra.mxu0 0.0
    %329 = vmatprep.subr.mxu0 0.0
    %330 = vmatpush2.msra.mxu0 0.0
    %331 = vmatprep.subr.mxu0 0.0
    %332 = vmatpush2.msra.mxu0 0.0
    %333 = vmatprep.subr.mxu0 0.0
    %334 = vmatpush2.msra.mxu0 0.0
    %335 = vmatprep.subr.mxu0 0.0
    %336 = vmatpush2.msra.mxu0 0.0
    %337 = vmatprep.subr.mxu0 0.0
    %338 = vmatpush2.msra.mxu0 0.0
    %339 = vmatprep.subr.mxu0 0.0
    %340 = vmatpush2.msra.mxu0 0.0
    %341 = vmatprep.subr.mxu0 0.0
    %342 = vmatpush2.msra.mxu0 0.0
    %343 = vmatprep.subr.mxu0 0.0
    %344 = vmatpush2.msra.mxu0 0.0
    %345 = vmatprep.mubr.f32.mxu0 0.0
    %346 = vmatmul.mubr.f32.gmra.mxu0 %v90
    %v347 = vpop.f32.mrf.mxu0
    %v348 = vadd.f32 %v87, %v347
    %v349 = vpop.f32.mrf.mxu0
    %350 = vmatprep.mubr.f32.mxu0 0.0
    %351 = vmatmul.mubr.f32.gmra.mxu0 %v93
    %v352 = vpop.f32.mrf.mxu0
    %v353 = vadd.f32 %v87, %v352
    %v354 = vpop.f32.mrf.mxu0
    %355 = vmatprep.mubr.f32.mxu0 0.0
    %356 = vmatmul.mubr.f32.gmra.mxu0 %v96
    %v357 = vpop.f32.mrf.mxu0
    %v358 = vadd.f32 %v87, %v357
    %v359 = vpop.f32.mrf.mxu0
    %360 = vmatprep.mubr.f32.mxu0 0.0
    %361 = vmatmul.mubr.f32.gmra.mxu0 %v99
    %v362 = vpop.f32.mrf.mxu0
    %v363 = vadd.f32 %v87, %v362
    %v364 = vpop.f32.mrf.mxu0
    %365 = vmatprep.mubr.f32.mxu0 0.0
    %366 = vmatmul.mubr.f32.gmra.mxu0 %v102
    %v367 = vpop.f32.mrf.mxu0
    %v368 = vadd.f32 %v87, %v367
    %v369 = vpop.f32.mrf.mxu0
    %370 = vmatprep.mubr.f32.mxu0 0.0
    %371 = vmatmul.mubr.f32.gmra.mxu0 %v105
    %v372 = vpop.f32.mrf.mxu0
    %v373 = vadd.f32 %v87, %v372
    %v374 = vpop.f32.mrf.mxu0
    %375 = vmatprep.mubr.f32.mxu0 0.0
    %376 = vmatmul.mubr.f32.gmra.mxu0 %v108
    %v377 = vpop.f32.mrf.mxu0
    %v378 = vadd.f32 %v87, %v377
    %v379 = vpop.f32.mrf.mxu0
    %380 = vmatprep.mubr.f32.mxu0 0.0
    %381 = vmatmul.mubr.f32.gmra.mxu0 %v111
    %v382 = vpop.f32.mrf.mxu0
    %v383 = vadd.f32 %v87, %v382
    %v384 = vpop.f32.mrf.mxu0
    %385 = vmatprep.mubr.f32.mxu0 0.0
    %386 = vmatmul.mubr.f32.gmra.mxu0 %v114
    %v387 = vpop.f32.mrf.mxu0
    %v388 = vadd.f32 %v87, %v387
    %v389 = vpop.f32.mrf.mxu0
    %390 = vmatprep.mubr.f32.mxu0 0.0
    %391 = vmatmul.mubr.f32.gmra.mxu0 %v117
    %v392 = vpop.f32.mrf.mxu0
    %v393 = vadd.f32 %v87, %v392
    %v394 = vpop.f32.mrf.mxu0
    %395 = vmatprep.mubr.f32.mxu0 0.0
    %396 = vmatmul.mubr.f32.gmra.mxu0 %v120
    %v397 = vpop.f32.mrf.mxu0
    %v398 = vadd.f32 %v87, %v397
    %v399 = vpop.f32.mrf.mxu0
    %400 = vmatprep.mubr.f32.mxu0 0.0
    %401 = vmatmul.mubr.f32.gmra.mxu0 %v123
    %v402 = vpop.f32.mrf.mxu0
    %v403 = vadd.f32 %v87, %v402
    %v404 = vpop.f32.mrf.mxu0
    %405 = vmatprep.mubr.f32.mxu0 0.0
    %406 = vmatmul.mubr.f32.gmra.mxu0 %v126
    %v407 = vpop.f32.mrf.mxu0
    %v408 = vadd.f32 %v87, %v407
    %v409 = vpop.f32.mrf.mxu0
    %410 = vmatprep.mubr.f32.mxu0 0.0
    %411 = vmatmul.mubr.f32.gmra.mxu0 %v129
    %v412 = vpop.f32.mrf.mxu0
    %v413 = vadd.f32 %v87, %v412
    %v414 = vpop.f32.mrf.mxu0
    %415 = vmatprep.mubr.f32.mxu0 0.0
    %416 = vmatmul.mubr.f32.gmra.mxu0 %v132
    %v417 = vpop.f32.mrf.mxu0
    %v418 = vadd.f32 %v87, %v417
    %v419 = vpop.f32.mrf.mxu0
    %420 = vmatprep.mubr.f32.mxu0 0.0
    %421 = vmatmul.mubr.f32.gmra.mxu0 %v135
    %v422 = vpop.f32.mrf.mxu0
    %v423 = vadd.f32 %v87, %v422
    %v424 = vpop.f32.mrf.mxu0
    %425 = vmatprep.mubr.f32.mxu0 0.0
    %426 = vmatmul.mubr.f32.gmra.mxu0 %v138
    %v427 = vpop.f32.mrf.mxu0
    %v428 = vadd.f32 %v87, %v427
    %v429 = vpop.f32.mrf.mxu0
    %430 = vmatprep.mubr.f32.mxu0 0.0
    %431 = vmatmul.mubr.f32.gmra.mxu0 %v141
    %v432 = vpop.f32.mrf.mxu0
    %v433 = vadd.f32 %v87, %v432
    %v434 = vpop.f32.mrf.mxu0
    %435 = vmatprep.mubr.f32.mxu0 0.0
    %436 = vmatmul.mubr.f32.gmra.mxu0 %v144
    %v437 = vpop.f32.mrf.mxu0
    %v438 = vadd.f32 %v87, %v437
    %v439 = vpop.f32.mrf.mxu0
    %440 = vmatprep.mubr.f32.mxu0 0.0
    %441 = vmatmul.mubr.f32.gmra.mxu0 %v147
    %v442 = vpop.f32.mrf.mxu0
    %v443 = vadd.f32 %v87, %v442
    %v444 = vpop.f32.mrf.mxu0
    %445 = vmatprep.mubr.f32.mxu0 0.0
    %446 = vmatmul.mubr.f32.gmra.mxu0 %v150
    %v447 = vpop.f32.mrf.mxu0
    %v448 = vadd.f32 %v87, %v447
    %v449 = vpop.f32.mrf.mxu0
    %450 = vmatprep.mubr.f32.mxu0 0.0
    %451 = vmatmul.mubr.f32.gmra.mxu0 %v153
    %v452 = vpop.f32.mrf.mxu0
    %v453 = vadd.f32 %v87, %v452
    %v454 = vpop.f32.mrf.mxu0
    %455 = vmatprep.mubr.f32.mxu0 0.0
    %456 = vmatmul.mubr.f32.gmra.mxu0 %v156
    %v457 = vpop.f32.mrf.mxu0
    %v458 = vadd.f32 %v87, %v457
    %v459 = vpop.f32.mrf.mxu0
    %460 = vmatprep.mubr.f32.mxu0 0.0
    %461 = vmatmul.mubr.f32.gmra.mxu0 %v159
    %v462 = vpop.f32.mrf.mxu0
    %v463 = vadd.f32 %v87, %v462
    %v464 = vpop.f32.mrf.mxu0
    %465 = vmatprep.mubr.f32.mxu0 0.0
    %466 = vmatmul.mubr.f32.gmra.mxu0 %v162
    %v467 = vpop.f32.mrf.mxu0
    %v468 = vadd.f32 %v87, %v467
    %v469 = vpop.f32.mrf.mxu0
    %470 = vmatprep.mubr.f32.mxu0 0.0
    %471 = vmatmul.mubr.f32.gmra.mxu0 %v165
    %v472 = vpop.f32.mrf.mxu0
    %v473 = vadd.f32 %v87, %v472
    %v474 = vpop.f32.mrf.mxu0
    %475 = vmatprep.mubr.f32.mxu0 0.0
    %476 = vmatmul.mubr.f32.gmra.mxu0 %v168
    %v477 = vpop.f32.mrf.mxu0
    %v478 = vadd.f32 %v87, %v477
    %v479 = vpop.f32.mrf.mxu0
    %480 = vmatprep.mubr.f32.mxu0 0.0
    %481 = vmatmul.mubr.f32.gmra.mxu0 %v171
    %v482 = vpop.f32.mrf.mxu0
    %v483 = vadd.f32 %v87, %v482
    %v484 = vpop.f32.mrf.mxu0
    %485 = vmatprep.mubr.f32.mxu0 0.0
    %486 = vmatmul.mubr.f32.gmra.mxu0 %v174
    %v487 = vpop.f32.mrf.mxu0
    %v488 = vadd.f32 %v87, %v487
    %v489 = vpop.f32.mrf.mxu0
    %490 = vmatprep.mubr.f32.mxu0 0.0
    %491 = vmatmul.mubr.f32.gmra.mxu0 %v177
    %v492 = vpop.f32.mrf.mxu0
    %v493 = vadd.f32 %v87, %v492
    %v494 = vpop.f32.mrf.mxu0
    %495 = vmatprep.mubr.f32.mxu0 0.0
    %496 = vmatmul.mubr.f32.gmra.mxu0 %v180
    %v497 = vpop.f32.mrf.mxu0
    %v498 = vadd.f32 %v87, %v497
    %v499 = vpop.f32.mrf.mxu0
    %500 = vmatprep.mubr.f32.mxu0 0.0
    %501 = vmatmul.mubr.f32.gmra.mxu0 %v183
    %v502 = vpop.f32.mrf.mxu0
    %v503 = vadd.f32 %v87, %v502
    %v504 = vpop.f32.mrf.mxu0
    %505 = vmatprep.mubr.f32.mxu0 0.0
    %506 = vmatmul.mubr.f32.gmra.mxu0 %v186
    %v507 = vpop.f32.mrf.mxu0
    %v508 = vadd.f32 %v87, %v507
    %v509 = vpop.f32.mrf.mxu0
    %510 = vmatprep.mubr.f32.mxu0 0.0
    %511 = vmatmul.mubr.f32.gmra.mxu0 %v189
    %v512 = vpop.f32.mrf.mxu0
    %v513 = vadd.f32 %v87, %v512
    %v514 = vpop.f32.mrf.mxu0
    %515 = vmatprep.mubr.f32.mxu0 0.0
    %516 = vmatmul.mubr.f32.gmra.mxu0 %v192
    %v517 = vpop.f32.mrf.mxu0
    %v518 = vadd.f32 %v87, %v517
    %v519 = vpop.f32.mrf.mxu0
    %520 = vmatprep.mubr.f32.mxu0 0.0
    %521 = vmatmul.mubr.f32.gmra.mxu0 %v195
    %v522 = vpop.f32.mrf.mxu0
    %v523 = vadd.f32 %v87, %v522
    %v524 = vpop.f32.mrf.mxu0
    %525 = vmatprep.mubr.f32.mxu0 0.0
    %526 = vmatmul.mubr.f32.gmra.mxu0 %v198
    %v527 = vpop.f32.mrf.mxu0
    %v528 = vadd.f32 %v87, %v527
    %v529 = vpop.f32.mrf.mxu0
    %530 = vmatprep.mubr.f32.mxu0 0.0
    %531 = vmatmul.mubr.f32.gmra.mxu0 %v201
    %v532 = vpop.f32.mrf.mxu0
    %v533 = vadd.f32 %v87, %v532
    %v534 = vpop.f32.mrf.mxu0
    %535 = vmatprep.mubr.f32.mxu0 0.0
    %536 = vmatmul.mubr.f32.gmra.mxu0 %v204
    %v537 = vpop.f32.mrf.mxu0
    %v538 = vadd.f32 %v87, %v537
    %v539 = vpop.f32.mrf.mxu0
    %540 = vmatprep.mubr.f32.mxu0 0.0
    %541 = vmatmul.mubr.f32.gmra.mxu0 %v207
    %v542 = vpop.f32.mrf.mxu0
    %v543 = vadd.f32 %v87, %v542
    %v544 = vpop.f32.mrf.mxu0
    %545 = vmatprep.mubr.f32.mxu0 0.0
    %546 = vmatmul.mubr.f32.gmra.mxu0 %v210
    %v547 = vpop.f32.mrf.mxu0
    %v548 = vadd.f32 %v87, %v547
    %v549 = vpop.f32.mrf.mxu0
    %550 = vmatprep.mubr.f32.mxu0 0.0
    %551 = vmatmul.mubr.f32.gmra.mxu0 %v213
    %v552 = vpop.f32.mrf.mxu0
    %v553 = vadd.f32 %v87, %v552
    %v554 = vpop.f32.mrf.mxu0
    %555 = vmatprep.mubr.f32.mxu0 0.0
    %556 = vmatmul.mubr.f32.gmra.mxu0 %v216
    %v557 = vpop.f32.mrf.mxu0
    %v558 = vadd.f32 %v87, %v557
    %v559 = vpop.f32.mrf.mxu0
    %560 = vmatprep.mubr.f32.mxu0 0.0
    %561 = vmatmul.mubr.f32.gmra.mxu0 %v219
    %v562 = vpop.f32.mrf.mxu0
    %v563 = vadd.f32 %v87, %v562
    %v564 = vpop.f32.mrf.mxu0
    %565 = vmatprep.mubr.f32.mxu0 0.0
    %566 = vmatmul.mubr.f32.gmra.mxu0 %v222
    %v567 = vpop.f32.mrf.mxu0
    %v568 = vadd.f32 %v87, %v567
    %v569 = vpop.f32.mrf.mxu0
    %570 = vmatprep.mubr.f32.mxu0 0.0
    %571 = vmatmul.mubr.f32.gmra.mxu0 %v225
    %v572 = vpop.f32.mrf.mxu0
    %v573 = vadd.f32 %v87, %v572
    %v574 = vpop.f32.mrf.mxu0
    %575 = vmatprep.mubr.f32.mxu0 0.0
    %576 = vmatmul.mubr.f32.gmra.mxu0 %v228
    %v577 = vpop.f32.mrf.mxu0
    %v578 = vadd.f32 %v87, %v577
    %v579 = vpop.f32.mrf.mxu0
    %580 = vmatprep.mubr.f32.mxu0 0.0
    %581 = vmatmul.mubr.f32.gmra.mxu0 %v231
    %v582 = vpop.f32.mrf.mxu0
    %v583 = vadd.f32 %v87, %v582
    %v584 = vpop.f32.mrf.mxu0
    %585 = vmatprep.mubr.f32.mxu0 0.0
    %586 = vmatmul.mubr.f32.gmra.mxu0 %v234
    %v587 = vpop.f32.mrf.mxu0
    %v588 = vadd.f32 %v87, %v587
    %v589 = vpop.f32.mrf.mxu0
    %590 = vmatprep.mubr.f32.mxu0 0.0
    %591 = vmatmul.mubr.f32.gmra.mxu0 %v237
    %v592 = vpop.f32.mrf.mxu0
    %v593 = vadd.f32 %v87, %v592
    %v594 = vpop.f32.mrf.mxu0
    %595 = vmatprep.mubr.f32.mxu0 0.0
    %596 = vmatmul.mubr.f32.gmra.mxu0 %v240
    %v597 = vpop.f32.mrf.mxu0
    %v598 = vadd.f32 %v87, %v597
    %v599 = vpop.f32.mrf.mxu0
    %600 = vmatprep.mubr.f32.mxu0 0.0
    %601 = vmatmul.mubr.f32.gmra.mxu0 %v243
    %v602 = vpop.f32.mrf.mxu0
    %v603 = vadd.f32 %v87, %v602
    %v604 = vpop.f32.mrf.mxu0
    %605 = vmatprep.mubr.f32.mxu0 0.0
    %606 = vmatmul.mubr.f32.gmra.mxu0 %v246
    %v607 = vpop.f32.mrf.mxu0
    %v608 = vadd.f32 %v87, %v607
    %v609 = vpop.f32.mrf.mxu0
    %610 = vmatprep.mubr.f32.mxu0 0.0
    %611 = vmatmul.mubr.f32.gmra.mxu0 %v249
    %v612 = vpop.f32.mrf.mxu0
    %v613 = vadd.f32 %v87, %v612
    %v614 = vpop.f32.mrf.mxu0
    %615 = vmatprep.mubr.f32.mxu0 0.0
    %616 = vmatmul.mubr.f32.gmra.mxu0 %v252
    %v617 = vpop.f32.mrf.mxu0
    %v618 = vadd.f32 %v87, %v617
    %v619 = vpop.f32.mrf.mxu0
    %620 = vmatprep.mubr.f32.mxu0 0.0
    %621 = vmatmul.mubr.f32.gmra.mxu0 %v255
    %v622 = vpop.f32.mrf.mxu0
    %v623 = vadd.f32 %v87, %v622
    %v624 = vpop.f32.mrf.mxu0
    %625 = vmatprep.mubr.f32.mxu0 0.0
    %626 = vmatmul.mubr.f32.gmra.mxu0 %v258
    %v627 = vpop.f32.mrf.mxu0
    %v628 = vadd.f32 %v87, %v627
    %v629 = vpop.f32.mrf.mxu0
    %630 = vmatprep.mubr.f32.mxu0 0.0
    %631 = vmatmul.mubr.f32.gmra.mxu0 %v261
    %v632 = vpop.f32.mrf.mxu0
    %v633 = vadd.f32 %v87, %v632
    %v634 = vpop.f32.mrf.mxu0
    %635 = vmatprep.mubr.f32.mxu0 0.0
    %636 = vmatmul.mubr.f32.gmra.mxu0 %v264
    %v637 = vpop.f32.mrf.mxu0
    %v638 = vadd.f32 %v87, %v637
    %v639 = vpop.f32.mrf.mxu0
    %640 = vmatprep.mubr.f32.mxu0 0.0
    %641 = vmatmul.mubr.f32.gmra.mxu0 %v267
    %v642 = vpop.f32.mrf.mxu0
    %v643 = vadd.f32 %v87, %v642
    %v644 = vpop.f32.mrf.mxu0
    %645 = vmatprep.mubr.f32.mxu0 0.0
    %646 = vmatmul.mubr.f32.gmra.mxu0 %v270
    %v647 = vpop.f32.mrf.mxu0
    %v648 = vadd.f32 %v87, %v647
    %v649 = vpop.f32.mrf.mxu0
    %650 = vmatprep.mubr.f32.mxu0 0.0
    %651 = vmatmul.mubr.f32.gmra.mxu0 %v273
    %v652 = vpop.f32.mrf.mxu0
    %v653 = vadd.f32 %v87, %v652
    %v654 = vpop.f32.mrf.mxu0
    %655 = vmatprep.mubr.f32.mxu0 0.0
    %656 = vmatmul.mubr.f32.gmra.mxu0 %v276
    %v657 = vpop.f32.mrf.mxu0
    %v658 = vadd.f32 %v87, %v657
    %v659 = vpop.f32.mrf.mxu0
    %660 = vmatprep.mubr.f32.mxu0 0.0
    %661 = vmatmul.mubr.f32.gmra.mxu0 %v279
    %v662 = vpop.f32.mrf.mxu0
    %v663 = vadd.f32 %v87, %v662
    %v664 = vpop.f32.mrf.mxu0
    %665 = vdwg.mxu0
    %666 = vadd.xlane.f32.xlu0 %v348
    %v667 = vpop.xlane.xlu0 %666
    %668 = vadd.xlane.f32.xlu0 %v353
    %v669 = vpop.xlane.xlu0 %668
    %670 = vadd.xlane.f32.xlu0 %v358
    %v671 = vpop.xlane.xlu0 %670
    %672 = vadd.xlane.f32.xlu0 %v363
    %v673 = vpop.xlane.xlu0 %672
    %674 = vadd.xlane.f32.xlu0 %v368
    %v675 = vpop.xlane.xlu0 %674
    %676 = vadd.xlane.f32.xlu0 %v373
    %v677 = vpop.xlane.xlu0 %676
    %678 = vadd.xlane.f32.xlu0 %v378
    %v679 = vpop.xlane.xlu0 %678
    %680 = vadd.xlane.f32.xlu0 %v383
    %v681 = vpop.xlane.xlu0 %680
    %682 = vadd.xlane.f32.xlu0 %v388
    %v683 = vpop.xlane.xlu0 %682
    %684 = vadd.xlane.f32.xlu0 %v393
    %v685 = vpop.xlane.xlu0 %684
    %686 = vadd.xlane.f32.xlu0 %v398
    %v687 = vpop.xlane.xlu0 %686
    %688 = vadd.xlane.f32.xlu0 %v403
    %v689 = vpop.xlane.xlu0 %688
    %690 = vadd.xlane.f32.xlu0 %v408
    %v691 = vpop.xlane.xlu0 %690
    %692 = vadd.xlane.f32.xlu0 %v413
    %v693 = vpop.xlane.xlu0 %692
    %694 = vadd.xlane.f32.xlu0 %v418
    %v695 = vpop.xlane.xlu0 %694
    %696 = vadd.xlane.f32.xlu0 %v423
    %v697 = vpop.xlane.xlu0 %696
    %698 = vadd.xlane.f32.xlu0 %v428
    %v699 = vpop.xlane.xlu0 %698
    %700 = vadd.xlane.f32.xlu0 %v433
    %v701 = vpop.xlane.xlu0 %700
    %702 = vadd.xlane.f32.xlu0 %v438
    %v703 = vpop.xlane.xlu0 %702
    %704 = vadd.xlane.f32.xlu0 %v443
    %v705 = vpop.xlane.xlu0 %704
    %706 = vadd.xlane.f32.xlu0 %v448
    %v707 = vpop.xlane.xlu0 %706
    %708 = vadd.xlane.f32.xlu0 %v453
    %v709 = vpop.xlane.xlu0 %708
    %710 = vadd.xlane.f32.xlu0 %v458
    %v711 = vpop.xlane.xlu0 %710
    %712 = vadd.xlane.f32.xlu0 %v463
    %v713 = vpop.xlane.xlu0 %712
    %714 = vadd.xlane.f32.xlu0 %v468
    %v715 = vpop.xlane.xlu0 %714
    %716 = vadd.xlane.f32.xlu0 %v473
    %v717 = vpop.xlane.xlu0 %716
    %718 = vadd.xlane.f32.xlu0 %v478
    %v719 = vpop.xlane.xlu0 %718
    %720 = vadd.xlane.f32.xlu0 %v483
    %v721 = vpop.xlane.xlu0 %720
    %722 = vadd.xlane.f32.xlu0 %v488
    %v723 = vpop.xlane.xlu0 %722
    %724 = vadd.xlane.f32.xlu0 %v493
    %v725 = vpop.xlane.xlu0 %724
    %726 = vadd.xlane.f32.xlu0 %v498
    %v727 = vpop.xlane.xlu0 %726
    %728 = vadd.xlane.f32.xlu0 %v503
    %v729 = vpop.xlane.xlu0 %728
    %730 = vadd.xlane.f32.xlu0 %v508
    %v731 = vpop.xlane.xlu0 %730
    %732 = vadd.xlane.f32.xlu0 %v513
    %v733 = vpop.xlane.xlu0 %732
    %734 = vadd.xlane.f32.xlu0 %v518
    %v735 = vpop.xlane.xlu0 %734
    %736 = vadd.xlane.f32.xlu0 %v523
    %v737 = vpop.xlane.xlu0 %736
    %738 = vadd.xlane.f32.xlu0 %v528
    %v739 = vpop.xlane.xlu0 %738
    %740 = vadd.xlane.f32.xlu0 %v533
    %v741 = vpop.xlane.xlu0 %740
    %742 = vadd.xlane.f32.xlu0 %v538
    %v743 = vpop.xlane.xlu0 %742
    %744 = vadd.xlane.f32.xlu0 %v543
    %v745 = vpop.xlane.xlu0 %744
    %746 = vadd.xlane.f32.xlu0 %v548
    %v747 = vpop.xlane.xlu0 %746
    %748 = vadd.xlane.f32.xlu0 %v553
    %v749 = vpop.xlane.xlu0 %748
    %750 = vadd.xlane.f32.xlu0 %v558
    %v751 = vpop.xlane.xlu0 %750
    %752 = vadd.xlane.f32.xlu0 %v563
    %v753 = vpop.xlane.xlu0 %752
    %754 = vadd.xlane.f32.xlu0 %v568
    %v755 = vpop.xlane.xlu0 %754
    %756 = vadd.xlane.f32.xlu0 %v573
    %v757 = vpop.xlane.xlu0 %756
    %758 = vadd.xlane.f32.xlu0 %v578
    %v759 = vpop.xlane.xlu0 %758
    %760 = vadd.xlane.f32.xlu0 %v583
    %v761 = vpop.xlane.xlu0 %760
    %762 = vadd.xlane.f32.xlu0 %v588
    %v763 = vpop.xlane.xlu0 %762
    %764 = vadd.xlane.f32.xlu0 %v593
    %v765 = vpop.xlane.xlu0 %764
    %766 = vadd.xlane.f32.xlu0 %v598
    %v767 = vpop.xlane.xlu0 %766
    %768 = vadd.xlane.f32.xlu0 %v603
    %v769 = vpop.xlane.xlu0 %768
    %770 = vadd.xlane.f32.xlu0 %v608
    %v771 = vpop.xlane.xlu0 %770
    %772 = vadd.xlane.f32.xlu0 %v613
    %v773 = vpop.xlane.xlu0 %772
    %774 = vadd.xlane.f32.xlu0 %v618
    %v775 = vpop.xlane.xlu0 %774
    %776 = vadd.xlane.f32.xlu0 %v623
    %v777 = vpop.xlane.xlu0 %776
    %778 = vadd.xlane.f32.xlu0 %v628
    %v779 = vpop.xlane.xlu0 %778
    %780 = vadd.xlane.f32.xlu0 %v633
    %v781 = vpop.xlane.xlu0 %780
    %782 = vadd.xlane.f32.xlu0 %v638
    %v783 = vpop.xlane.xlu0 %782
    %784 = vadd.xlane.f32.xlu0 %v643
    %v785 = vpop.xlane.xlu0 %784
    %786 = vadd.xlane.f32.xlu0 %v648
    %v787 = vpop.xlane.xlu0 %786
    %788 = vadd.xlane.f32.xlu0 %v653
    %v789 = vpop.xlane.xlu0 %788
    %790 = vadd.xlane.f32.xlu0 %v658
    %v791 = vpop.xlane.xlu0 %790
    %792 = vadd.xlane.f32.xlu0 %v663
    %v793 = vpop.xlane.xlu0 %792
    %v794 = vrcp.pop 128.0
    %v795 = vmul.f32 %v667, %v794
    %v796 = vmul.f32 %v669, %v794
    %v797 = vmul.f32 %v671, %v794
    %v798 = vmul.f32 %v673, %v794
    %v799 = vmul.f32 %v675, %v794
    %v800 = vmul.f32 %v677, %v794
    %v801 = vmul.f32 %v679, %v794
    %v802 = vmul.f32 %v681, %v794
    %v803 = vmul.f32 %v683, %v794
    %v804 = vmul.f32 %v685, %v794
    %v805 = vmul.f32 %v687, %v794
    %v806 = vmul.f32 %v689, %v794
    %v807 = vmul.f32 %v691, %v794
    %v808 = vmul.f32 %v693, %v794
    %v809 = vmul.f32 %v695, %v794
    %v810 = vmul.f32 %v697, %v794
    %v811 = vmul.f32 %v699, %v794
    %v812 = vmul.f32 %v701, %v794
    %v813 = vmul.f32 %v703, %v794
    %v814 = vmul.f32 %v705, %v794
    %v815 = vmul.f32 %v707, %v794
    %v816 = vmul.f32 %v709, %v794
    %v817 = vmul.f32 %v711, %v794
    %v818 = vmul.f32 %v713, %v794
    %v819 = vmul.f32 %v715, %v794
    %v820 = vmul.f32 %v717, %v794
    %v821 = vmul.f32 %v719, %v794
    %v822 = vmul.f32 %v721, %v794
    %v823 = vmul.f32 %v723, %v794
    %v824 = vmul.f32 %v725, %v794
    %v825 = vmul.f32 %v727, %v794
    %v826 = vmul.f32 %v729, %v794
    %v827 = vmul.f32 %v731, %v794
    %v828 = vmul.f32 %v733, %v794
    %v829 = vmul.f32 %v735, %v794
    %v830 = vmul.f32 %v737, %v794
    %v831 = vmul.f32 %v739, %v794
    %v832 = vmul.f32 %v741, %v794
    %v833 = vmul.f32 %v743, %v794
    %v834 = vmul.f32 %v745, %v794
    %v835 = vmul.f32 %v747, %v794
    %v836 = vmul.f32 %v749, %v794
    %v837 = vmul.f32 %v751, %v794
    %v838 = vmul.f32 %v753, %v794
    %v839 = vmul.f32 %v755, %v794
    %v840 = vmul.f32 %v757, %v794
    %v841 = vmul.f32 %v759, %v794
    %v842 = vmul.f32 %v761, %v794
    %v843 = vmul.f32 %v763, %v794
    %v844 = vmul.f32 %v765, %v794
    %v845 = vmul.f32 %v767, %v794
    %v846 = vmul.f32 %v769, %v794
    %v847 = vmul.f32 %v771, %v794
    %v848 = vmul.f32 %v773, %v794
    %v849 = vmul.f32 %v775, %v794
    %v850 = vmul.f32 %v777, %v794
    %v851 = vmul.f32 %v779, %v794
    %v852 = vmul.f32 %v781, %v794
    %v853 = vmul.f32 %v783, %v794
    %v854 = vmul.f32 %v785, %v794
    %v855 = vmul.f32 %v787, %v794
    %v856 = vmul.f32 %v789, %v794
    %v857 = vmul.f32 %v791, %v794
    %v858 = vmul.f32 %v793, %v794
    %v859 = vsub.f32 %v348, %v795
    %v860 = vsub.f32 %v353, %v796
    %v861 = vsub.f32 %v358, %v797
    %v862 = vsub.f32 %v363, %v798
    %v863 = vsub.f32 %v368, %v799
    %v864 = vsub.f32 %v373, %v800
    %v865 = vsub.f32 %v378, %v801
    %v866 = vsub.f32 %v383, %v802
    %v867 = vsub.f32 %v388, %v803
    %v868 = vsub.f32 %v393, %v804
    %v869 = vsub.f32 %v398, %v805
    %v870 = vsub.f32 %v403, %v806
    %v871 = vsub.f32 %v408, %v807
    %v872 = vsub.f32 %v413, %v808
    %v873 = vsub.f32 %v418, %v809
    %v874 = vsub.f32 %v423, %v810
    %v875 = vsub.f32 %v428, %v811
    %v876 = vsub.f32 %v433, %v812
    %v877 = vsub.f32 %v438, %v813
    %v878 = vsub.f32 %v443, %v814
    %v879 = vsub.f32 %v448, %v815
    %v880 = vsub.f32 %v453, %v816
    %v881 = vsub.f32 %v458, %v817
    %v882 = vsub.f32 %v463, %v818
    %v883 = vsub.f32 %v468, %v819
    %v884 = vsub.f32 %v473, %v820
    %v885 = vsub.f32 %v478, %v821
    %v886 = vsub.f32 %v483, %v822
    %v887 = vsub.f32 %v488, %v823
    %v888 = vsub.f32 %v493, %v824
    %v889 = vsub.f32 %v498, %v825
    %v890 = vsub.f32 %v503, %v826
    %v891 = vsub.f32 %v508, %v827
    %v892 = vsub.f32 %v513, %v828
    %v893 = vsub.f32 %v518, %v829
    %v894 = vsub.f32 %v523, %v830
    %v895 = vsub.f32 %v528, %v831
    %v896 = vsub.f32 %v533, %v832
    %v897 = vsub.f32 %v538, %v833
    %v898 = vsub.f32 %v543, %v834
    %v899 = vsub.f32 %v548, %v835
    %v900 = vsub.f32 %v553, %v836
    %v901 = vsub.f32 %v558, %v837
    %v902 = vsub.f32 %v563, %v838
    %v903 = vsub.f32 %v568, %v839
    %v904 = vsub.f32 %v573, %v840
    %v905 = vsub.f32 %v578, %v841
    %v906 = vsub.f32 %v583, %v842
    %v907 = vsub.f32 %v588, %v843
    %v908 = vsub.f32 %v593, %v844
    %v909 = vsub.f32 %v598, %v845
    %v910 = vsub.f32 %v603, %v846
    %v911 = vsub.f32 %v608, %v847
    %v912 = vsub.f32 %v613, %v848
    %v913 = vsub.f32 %v618, %v849
    %v914 = vsub.f32 %v623, %v850
    %v915 = vsub.f32 %v628, %v851
    %v916 = vsub.f32 %v633, %v852
    %v917 = vsub.f32 %v638, %v853
    %v918 = vsub.f32 %v643, %v854
    %v919 = vsub.f32 %v648, %v855
    %v920 = vsub.f32 %v653, %v856
    %v921 = vsub.f32 %v658, %v857
    %v922 = vsub.f32 %v663, %v858
    %v923 = vmul.f32 %v859, %v859
    %v924 = vmul.f32 %v860, %v860
    %v925 = vmul.f32 %v861, %v861
    %v926 = vmul.f32 %v862, %v862
    %v927 = vmul.f32 %v863, %v863
    %v928 = vmul.f32 %v864, %v864
    %v929 = vmul.f32 %v865, %v865
    %v930 = vmul.f32 %v866, %v866
    %v931 = vmul.f32 %v867, %v867
    %v932 = vmul.f32 %v868, %v868
    %v933 = vmul.f32 %v869, %v869
    %v934 = vmul.f32 %v870, %v870
    %v935 = vmul.f32 %v871, %v871
    %v936 = vmul.f32 %v872, %v872
    %v937 = vmul.f32 %v873, %v873
    %v938 = vmul.f32 %v874, %v874
    %v939 = vmul.f32 %v875, %v875
    %v940 = vmul.f32 %v876, %v876
    %v941 = vmul.f32 %v877, %v877
    %v942 = vmul.f32 %v878, %v878
    %v943 = vmul.f32 %v879, %v879
    %v944 = vmul.f32 %v880, %v880
    %v945 = vmul.f32 %v881, %v881
    %v946 = vmul.f32 %v882, %v882
    %v947 = vmul.f32 %v883, %v883
    %v948 = vmul.f32 %v884, %v884
    %v949 = vmul.f32 %v885, %v885
    %v950 = vmul.f32 %v886, %v886
    %v951 = vmul.f32 %v887, %v887
    %v952 = vmul.f32 %v888, %v888
    %v953 = vmul.f32 %v889, %v889
    %v954 = vmul.f32 %v890, %v890
    %v955 = vmul.f32 %v891, %v891
    %v956 = vmul.f32 %v892, %v892
    %v957 = vmul.f32 %v893, %v893
    %v958 = vmul.f32 %v894, %v894
    %v959 = vmul.f32 %v895, %v895
    %v960 = vmul.f32 %v896, %v896
    %v961 = vmul.f32 %v897, %v897
    %v962 = vmul.f32 %v898, %v898
    %v963 = vmul.f32 %v899, %v899
    %v964 = vmul.f32 %v900, %v900
    %v965 = vmul.f32 %v901, %v901
    %v966 = vmul.f32 %v902, %v902
    %v967 = vmul.f32 %v903, %v903
    %v968 = vmul.f32 %v904, %v904
    %v969 = vmul.f32 %v905, %v905
    %v970 = vmul.f32 %v906, %v906
    %v971 = vmul.f32 %v907, %v907
    %v972 = vmul.f32 %v908, %v908
    %v973 = vmul.f32 %v909, %v909
    %v974 = vmul.f32 %v910, %v910
    %v975 = vmul.f32 %v911, %v911
    %v976 = vmul.f32 %v912, %v912
    %v977 = vmul.f32 %v913, %v913
    %v978 = vmul.f32 %v914, %v914
    %v979 = vmul.f32 %v915, %v915
    %v980 = vmul.f32 %v916, %v916
    %v981 = vmul.f32 %v917, %v917
    %v982 = vmul.f32 %v918, %v918
    %v983 = vmul.f32 %v919, %v919
    %v984 = vmul.f32 %v920, %v920
    %v985 = vmul.f32 %v921, %v921
    %v986 = vmul.f32 %v922, %v922
    %987 = vadd.xlane.f32.xlu0 %v923
    %v988 = vpop.xlane.xlu0 %987
    %989 = vadd.xlane.f32.xlu0 %v924
    %v990 = vpop.xlane.xlu0 %989
    %991 = vadd.xlane.f32.xlu0 %v925
    %v992 = vpop.xlane.xlu0 %991
    %993 = vadd.xlane.f32.xlu0 %v926
    %v994 = vpop.xlane.xlu0 %993
    %995 = vadd.xlane.f32.xlu0 %v927
    %v996 = vpop.xlane.xlu0 %995
    %997 = vadd.xlane.f32.xlu0 %v928
    %v998 = vpop.xlane.xlu0 %997
    %999 = vadd.xlane.f32.xlu0 %v929
    %v1000 = vpop.xlane.xlu0 %999
    %1001 = vadd.xlane.f32.xlu0 %v930
    %v1002 = vpop.xlane.xlu0 %1001
    %1003 = vadd.xlane.f32.xlu0 %v931
    %v1004 = vpop.xlane.xlu0 %1003
    %1005 = vadd.xlane.f32.xlu0 %v932
    %v1006 = vpop.xlane.xlu0 %1005
    %1007 = vadd.xlane.f32.xlu0 %v933
    %v1008 = vpop.xlane.xlu0 %1007
    %1009 = vadd.xlane.f32.xlu0 %v934
    %v1010 = vpop.xlane.xlu0 %1009
    %1011 = vadd.xlane.f32.xlu0 %v935
    %v1012 = vpop.xlane.xlu0 %1011
    %1013 = vadd.xlane.f32.xlu0 %v936
    %v1014 = vpop.xlane.xlu0 %1013
    %1015 = vadd.xlane.f32.xlu0 %v937
    %v1016 = vpop.xlane.xlu0 %1015
    %1017 = vadd.xlane.f32.xlu0 %v938
    %v1018 = vpop.xlane.xlu0 %1017
    %1019 = vadd.xlane.f32.xlu0 %v939
    %v1020 = vpop.xlane.xlu0 %1019
    %1021 = vadd.xlane.f32.xlu0 %v940
    %v1022 = vpop.xlane.xlu0 %1021
    %1023 = vadd.xlane.f32.xlu0 %v941
    %v1024 = vpop.xlane.xlu0 %1023
    %1025 = vadd.xlane.f32.xlu0 %v942
    %v1026 = vpop.xlane.xlu0 %1025
    %1027 = vadd.xlane.f32.xlu0 %v943
    %v1028 = vpop.xlane.xlu0 %1027
    %1029 = vadd.xlane.f32.xlu0 %v944
    %v1030 = vpop.xlane.xlu0 %1029
    %1031 = vadd.xlane.f32.xlu0 %v945
    %v1032 = vpop.xlane.xlu0 %1031
    %1033 = vadd.xlane.f32.xlu0 %v946
    %v1034 = vpop.xlane.xlu0 %1033
    %1035 = vadd.xlane.f32.xlu0 %v947
    %v1036 = vpop.xlane.xlu0 %1035
    %1037 = vadd.xlane.f32.xlu0 %v948
    %v1038 = vpop.xlane.xlu0 %1037
    %1039 = vadd.xlane.f32.xlu0 %v949
    %v1040 = vpop.xlane.xlu0 %1039
    %1041 = vadd.xlane.f32.xlu0 %v950
    %v1042 = vpop.xlane.xlu0 %1041
    %1043 = vadd.xlane.f32.xlu0 %v951
    %v1044 = vpop.xlane.xlu0 %1043
    %1045 = vadd.xlane.f32.xlu0 %v952
    %v1046 = vpop.xlane.xlu0 %1045
    %1047 = vadd.xlane.f32.xlu0 %v953
    %v1048 = vpop.xlane.xlu0 %1047
    %1049 = vadd.xlane.f32.xlu0 %v954
    %v1050 = vpop.xlane.xlu0 %1049
    %1051 = vadd.xlane.f32.xlu0 %v955
    %v1052 = vpop.xlane.xlu0 %1051
    %1053 = vadd.xlane.f32.xlu0 %v956
    %v1054 = vpop.xlane.xlu0 %1053
    %1055 = vadd.xlane.f32.xlu0 %v957
    %v1056 = vpop.xlane.xlu0 %1055
    %1057 = vadd.xlane.f32.xlu0 %v958
    %v1058 = vpop.xlane.xlu0 %1057
    %1059 = vadd.xlane.f32.xlu0 %v959
    %v1060 = vpop.xlane.xlu0 %1059
    %1061 = vadd.xlane.f32.xlu0 %v960
    %v1062 = vpop.xlane.xlu0 %1061
    %1063 = vadd.xlane.f32.xlu0 %v961
    %v1064 = vpop.xlane.xlu0 %1063
    %1065 = vadd.xlane.f32.xlu0 %v962
    %v1066 = vpop.xlane.xlu0 %1065
    %1067 = vadd.xlane.f32.xlu0 %v963
    %v1068 = vpop.xlane.xlu0 %1067
    %1069 = vadd.xlane.f32.xlu0 %v964
    %v1070 = vpop.xlane.xlu0 %1069
    %1071 = vadd.xlane.f32.xlu0 %v965
    %v1072 = vpop.xlane.xlu0 %1071
    %1073 = vadd.xlane.f32.xlu0 %v966
    %v1074 = vpop.xlane.xlu0 %1073
    %1075 = vadd.xlane.f32.xlu0 %v967
    %v1076 = vpop.xlane.xlu0 %1075
    %1077 = vadd.xlane.f32.xlu0 %v968
    %v1078 = vpop.xlane.xlu0 %1077
    %1079 = vadd.xlane.f32.xlu0 %v969
    %v1080 = vpop.xlane.xlu0 %1079
    %1081 = vadd.xlane.f32.xlu0 %v970
    %v1082 = vpop.xlane.xlu0 %1081
    %1083 = vadd.xlane.f32.xlu0 %v971
    %v1084 = vpop.xlane.xlu0 %1083
    %1085 = vadd.xlane.f32.xlu0 %v972
    %v1086 = vpop.xlane.xlu0 %1085
    %1087 = vadd.xlane.f32.xlu0 %v973
    %v1088 = vpop.xlane.xlu0 %1087
    %1089 = vadd.xlane.f32.xlu0 %v974
    %v1090 = vpop.xlane.xlu0 %1089
    %1091 = vadd.xlane.f32.xlu0 %v975
    %v1092 = vpop.xlane.xlu0 %1091
    %1093 = vadd.xlane.f32.xlu0 %v976
    %v1094 = vpop.xlane.xlu0 %1093
    %1095 = vadd.xlane.f32.xlu0 %v977
    %v1096 = vpop.xlane.xlu0 %1095
    %1097 = vadd.xlane.f32.xlu0 %v978
    %v1098 = vpop.xlane.xlu0 %1097
    %1099 = vadd.xlane.f32.xlu0 %v979
    %v1100 = vpop.xlane.xlu0 %1099
    %1101 = vadd.xlane.f32.xlu0 %v980
    %v1102 = vpop.xlane.xlu0 %1101
    %1103 = vadd.xlane.f32.xlu0 %v981
    %v1104 = vpop.xlane.xlu0 %1103
    %1105 = vadd.xlane.f32.xlu0 %v982
    %v1106 = vpop.xlane.xlu0 %1105
    %1107 = vadd.xlane.f32.xlu0 %v983
    %v1108 = vpop.xlane.xlu0 %1107
    %1109 = vadd.xlane.f32.xlu0 %v984
    %v1110 = vpop.xlane.xlu0 %1109
    %1111 = vadd.xlane.f32.xlu0 %v985
    %v1112 = vpop.xlane.xlu0 %1111
    %1113 = vadd.xlane.f32.xlu0 %v986
    %v1114 = vpop.xlane.xlu0 %1113
    %v1115 = vmul.f32 %v988, %v794
    %v1116 = vmul.f32 %v990, %v794
    %v1117 = vmul.f32 %v992, %v794
    %v1118 = vmul.f32 %v994, %v794
    %v1119 = vmul.f32 %v996, %v794
    %v1120 = vmul.f32 %v998, %v794
    %v1121 = vmul.f32 %v1000, %v794
    %v1122 = vmul.f32 %v1002, %v794
    %v1123 = vmul.f32 %v1004, %v794
    %v1124 = vmul.f32 %v1006, %v794
    %v1125 = vmul.f32 %v1008, %v794
    %v1126 = vmul.f32 %v1010, %v794
    %v1127 = vmul.f32 %v1012, %v794
    %v1128 = vmul.f32 %v1014, %v794
    %v1129 = vmul.f32 %v1016, %v794
    %v1130 = vmul.f32 %v1018, %v794
    %v1131 = vmul.f32 %v1020, %v794
    %v1132 = vmul.f32 %v1022, %v794
    %v1133 = vmul.f32 %v1024, %v794
    %v1134 = vmul.f32 %v1026, %v794
    %v1135 = vmul.f32 %v1028, %v794
    %v1136 = vmul.f32 %v1030, %v794
    %v1137 = vmul.f32 %v1032, %v794
    %v1138 = vmul.f32 %v1034, %v794
    %v1139 = vmul.f32 %v1036, %v794
    %v1140 = vmul.f32 %v1038, %v794
    %v1141 = vmul.f32 %v1040, %v794
    %v1142 = vmul.f32 %v1042, %v794
    %v1143 = vmul.f32 %v1044, %v794
    %v1144 = vmul.f32 %v1046, %v794
    %v1145 = vmul.f32 %v1048, %v794
    %v1146 = vmul.f32 %v1050, %v794
    %v1147 = vmul.f32 %v1052, %v794
    %v1148 = vmul.f32 %v1054, %v794
    %v1149 = vmul.f32 %v1056, %v794
    %v1150 = vmul.f32 %v1058, %v794
    %v1151 = vmul.f32 %v1060, %v794
    %v1152 = vmul.f32 %v1062, %v794
    %v1153 = vmul.f32 %v1064, %v794
    %v1154 = vmul.f32 %v1066, %v794
    %v1155 = vmul.f32 %v1068, %v794
    %v1156 = vmul.f32 %v1070, %v794
    %v1157 = vmul.f32 %v1072, %v794
    %v1158 = vmul.f32 %v1074, %v794
    %v1159 = vmul.f32 %v1076, %v794
    %v1160 = vmul.f32 %v1078, %v794
    %v1161 = vmul.f32 %v1080, %v794
    %v1162 = vmul.f32 %v1082, %v794
    %v1163 = vmul.f32 %v1084, %v794
    %v1164 = vmul.f32 %v1086, %v794
    %v1165 = vmul.f32 %v1088, %v794
    %v1166 = vmul.f32 %v1090, %v794
    %v1167 = vmul.f32 %v1092, %v794
    %v1168 = vmul.f32 %v1094, %v794
    %v1169 = vmul.f32 %v1096, %v794
    %v1170 = vmul.f32 %v1098, %v794
    %v1171 = vmul.f32 %v1100, %v794
    %v1172 = vmul.f32 %v1102, %v794
    %v1173 = vmul.f32 %v1104, %v794
    %v1174 = vmul.f32 %v1106, %v794
    %v1175 = vmul.f32 %v1108, %v794
    %v1176 = vmul.f32 %v1110, %v794
    %v1177 = vmul.f32 %v1112, %v794
    %v1178 = vmul.f32 %v1114, %v794
    %v1179 = vadd.f32 %v1115, 1e-12
    %v1180 = vadd.f32 %v1116, 1e-12
    %v1181 = vadd.f32 %v1117, 1e-12
    %v1182 = vadd.f32 %v1118, 1e-12
    %v1183 = vadd.f32 %v1119, 1e-12
    %v1184 = vadd.f32 %v1120, 1e-12
    %v1185 = vadd.f32 %v1121, 1e-12
    %v1186 = vadd.f32 %v1122, 1e-12
    %v1187 = vadd.f32 %v1123, 1e-12
    %v1188 = vadd.f32 %v1124, 1e-12
    %v1189 = vadd.f32 %v1125, 1e-12
    %v1190 = vadd.f32 %v1126, 1e-12
    %v1191 = vadd.f32 %v1127, 1e-12
    %v1192 = vadd.f32 %v1128, 1e-12
    %v1193 = vadd.f32 %v1129, 1e-12
    %v1194 = vadd.f32 %v1130, 1e-12
    %v1195 = vadd.f32 %v1131, 1e-12
    %v1196 = vadd.f32 %v1132, 1e-12
    %v1197 = vadd.f32 %v1133, 1e-12
    %v1198 = vadd.f32 %v1134, 1e-12
    %v1199 = vadd.f32 %v1135, 1e-12
    %v1200 = vadd.f32 %v1136, 1e-12
    %v1201 = vadd.f32 %v1137, 1e-12
    %v1202 = vadd.f32 %v1138, 1e-12
    %v1203 = vadd.f32 %v1139, 1e-12
    %v1204 = vadd.f32 %v1140, 1e-12
    %v1205 = vadd.f32 %v1141, 1e-12
    %v1206 = vadd.f32 %v1142, 1e-12
    %v1207 = vadd.f32 %v1143, 1e-12
    %v1208 = vadd.f32 %v1144, 1e-12
    %v1209 = vadd.f32 %v1145, 1e-12
    %v1210 = vadd.f32 %v1146, 1e-12
    %v1211 = vadd.f32 %v1147, 1e-12
    %v1212 = vadd.f32 %v1148, 1e-12
    %v1213 = vadd.f32 %v1149, 1e-12
    %v1214 = vadd.f32 %v1150, 1e-12
    %v1215 = vadd.f32 %v1151, 1e-12
    %v1216 = vadd.f32 %v1152, 1e-12
    %v1217 = vadd.f32 %v1153, 1e-12
    %v1218 = vadd.f32 %v1154, 1e-12
    %v1219 = vadd.f32 %v1155, 1e-12
    %v1220 = vadd.f32 %v1156, 1e-12
    %v1221 = vadd.f32 %v1157, 1e-12
    %v1222 = vadd.f32 %v1158, 1e-12
    %v1223 = vadd.f32 %v1159, 1e-12
    %v1224 = vadd.f32 %v1160, 1e-12
    %v1225 = vadd.f32 %v1161, 1e-12
    %v1226 = vadd.f32 %v1162, 1e-12
    %v1227 = vadd.f32 %v1163, 1e-12
    %v1228 = vadd.f32 %v1164, 1e-12
    %v1229 = vadd.f32 %v1165, 1e-12
    %v1230 = vadd.f32 %v1166, 1e-12
    %v1231 = vadd.f32 %v1167, 1e-12
    %v1232 = vadd.f32 %v1168, 1e-12
    %v1233 = vadd.f32 %v1169, 1e-12
    %v1234 = vadd.f32 %v1170, 1e-12
    %v1235 = vadd.f32 %v1171, 1e-12
    %v1236 = vadd.f32 %v1172, 1e-12
    %v1237 = vadd.f32 %v1173, 1e-12
    %v1238 = vadd.f32 %v1174, 1e-12
    %v1239 = vadd.f32 %v1175, 1e-12
    %v1240 = vadd.f32 %v1176, 1e-12
    %v1241 = vadd.f32 %v1177, 1e-12
    %v1242 = vadd.f32 %v1178, 1e-12
    %v1243 = vrsqrt.pop %v1179
    %v1244 = vrsqrt.pop %v1180
    %v1245 = vrsqrt.pop %v1181
    %v1246 = vrsqrt.pop %v1182
    %v1247 = vrsqrt.pop %v1183
    %v1248 = vrsqrt.pop %v1184
    %v1249 = vrsqrt.pop %v1185
    %v1250 = vrsqrt.pop %v1186
    %v1251 = vrsqrt.pop %v1187
    %v1252 = vrsqrt.pop %v1188
    %v1253 = vrsqrt.pop %v1189
    %v1254 = vrsqrt.pop %v1190
    %v1255 = vrsqrt.pop %v1191
    %v1256 = vrsqrt.pop %v1192
    %v1257 = vrsqrt.pop %v1193
    %v1258 = vrsqrt.pop %v1194
    %v1259 = vrsqrt.pop %v1195
    %v1260 = vrsqrt.pop %v1196
    %v1261 = vrsqrt.pop %v1197
    %v1262 = vrsqrt.pop %v1198
    %v1263 = vrsqrt.pop %v1199
    %v1264 = vrsqrt.pop %v1200
    %v1265 = vrsqrt.pop %v1201
    %v1266 = vrsqrt.pop %v1202
    %v1267 = vrsqrt.pop %v1203
    %v1268 = vrsqrt.pop %v1204
    %v1269 = vrsqrt.pop %v1205
    %v1270 = vrsqrt.pop %v1206
    %v1271 = vrsqrt.pop %v1207
    %v1272 = vrsqrt.pop %v1208
    %v1273 = vrsqrt.pop %v1209
    %v1274 = vrsqrt.pop %v1210
    %v1275 = vrsqrt.pop %v1211
    %v1276 = vrsqrt.pop %v1212
    %v1277 = vrsqrt.pop %v1213
    %v1278 = vrsqrt.pop %v1214
    %v1279 = vrsqrt.pop %v1215
    %v1280 = vrsqrt.pop %v1216
    %v1281 = vrsqrt.pop %v1217
    %v1282 = vrsqrt.pop %v1218
    %v1283 = vrsqrt.pop %v1219
    %v1284 = vrsqrt.pop %v1220
    %v1285 = vrsqrt.pop %v1221
    %v1286 = vrsqrt.pop %v1222
    %v1287 = vrsqrt.pop %v1223
    %v1288 = vrsqrt.pop %v1224
    %v1289 = vrsqrt.pop %v1225
    %v1290 = vrsqrt.pop %v1226
    %v1291 = vrsqrt.pop %v1227
    %v1292 = vrsqrt.pop %v1228
    %v1293 = vrsqrt.pop %v1229
    %v1294 = vrsqrt.pop %v1230
    %v1295 = vrsqrt.pop %v1231
    %v1296 = vrsqrt.pop %v1232
    %v1297 = vrsqrt.pop %v1233
    %v1298 = vrsqrt.pop %v1234
    %v1299 = vrsqrt.pop %v1235
    %v1300 = vrsqrt.pop %v1236
    %v1301 = vrsqrt.pop %v1237
    %v1302 = vrsqrt.pop %v1238
    %v1303 = vrsqrt.pop %v1239
    %v1304 = vrsqrt.pop %v1240
    %v1305 = vrsqrt.pop %v1241
    %v1306 = vrsqrt.pop %v1242
    %v1307 = vmul.f32 %v859, %v1243
    %v1308 = vmul.f32 %v860, %v1244
    %v1309 = vmul.f32 %v861, %v1245
    %v1310 = vmul.f32 %v862, %v1246
    %v1311 = vmul.f32 %v863, %v1247
    %v1312 = vmul.f32 %v864, %v1248
    %v1313 = vmul.f32 %v865, %v1249
    %v1314 = vmul.f32 %v866, %v1250
    %v1315 = vmul.f32 %v867, %v1251
    %v1316 = vmul.f32 %v868, %v1252
    %v1317 = vmul.f32 %v869, %v1253
    %v1318 = vmul.f32 %v870, %v1254
    %v1319 = vmul.f32 %v871, %v1255
    %v1320 = vmul.f32 %v872, %v1256
    %v1321 = vmul.f32 %v873, %v1257
    %v1322 = vmul.f32 %v874, %v1258
    %v1323 = vmul.f32 %v875, %v1259
    %v1324 = vmul.f32 %v876, %v1260
    %v1325 = vmul.f32 %v877, %v1261
    %v1326 = vmul.f32 %v878, %v1262
    %v1327 = vmul.f32 %v879, %v1263
    %v1328 = vmul.f32 %v880, %v1264
    %v1329 = vmul.f32 %v881, %v1265
    %v1330 = vmul.f32 %v882, %v1266
    %v1331 = vmul.f32 %v883, %v1267
    %v1332 = vmul.f32 %v884, %v1268
    %v1333 = vmul.f32 %v885, %v1269
    %v1334 = vmul.f32 %v886, %v1270
    %v1335 = vmul.f32 %v887, %v1271
    %v1336 = vmul.f32 %v888, %v1272
    %v1337 = vmul.f32 %v889, %v1273
    %v1338 = vmul.f32 %v890, %v1274
    %v1339 = vmul.f32 %v891, %v1275
    %v1340 = vmul.f32 %v892, %v1276
    %v1341 = vmul.f32 %v893, %v1277
    %v1342 = vmul.f32 %v894, %v1278
    %v1343 = vmul.f32 %v895, %v1279
    %v1344 = vmul.f32 %v896, %v1280
    %v1345 = vmul.f32 %v897, %v1281
    %v1346 = vmul.f32 %v898, %v1282
    %v1347 = vmul.f32 %v899, %v1283
    %v1348 = vmul.f32 %v900, %v1284
    %v1349 = vmul.f32 %v901, %v1285
    %v1350 = vmul.f32 %v902, %v1286
    %v1351 = vmul.f32 %v903, %v1287
    %v1352 = vmul.f32 %v904, %v1288
    %v1353 = vmul.f32 %v905, %v1289
    %v1354 = vmul.f32 %v906, %v1290
    %v1355 = vmul.f32 %v907, %v1291
    %v1356 = vmul.f32 %v908, %v1292
    %v1357 = vmul.f32 %v909, %v1293
    %v1358 = vmul.f32 %v910, %v1294
    %v1359 = vmul.f32 %v911, %v1295
    %v1360 = vmul.f32 %v912, %v1296
    %v1361 = vmul.f32 %v913, %v1297
    %v1362 = vmul.f32 %v914, %v1298
    %v1363 = vmul.f32 %v915, %v1299
    %v1364 = vmul.f32 %v916, %v1300
    %v1365 = vmul.f32 %v917, %v1301
    %v1366 = vmul.f32 %v918, %v1302
    %v1367 = vmul.f32 %v919, %v1303
    %v1368 = vmul.f32 %v920, %v1304
    %v1369 = vmul.f32 %v921, %v1305
    %v1370 = vmul.f32 %v922, %v1306
    %v1371 = vld [vmem:[%s2 + $0x1] sm:$0x1]
    %v1372 = vlaneseq
    %v1373 = vshrl.u32 %v1372, 7
    %v1374 = vsub.s32 0, %v1373
    %v1375 = vrot.slane %v1371, %v1374
    %v1376 = vmul.f32 %v1307, %v1375
    %v1377 = vmul.f32 %v1308, %v1375
    %v1378 = vmul.f32 %v1309, %v1375
    %v1379 = vmul.f32 %v1310, %v1375
    %v1380 = vmul.f32 %v1311, %v1375
    %v1381 = vmul.f32 %v1312, %v1375
    %v1382 = vmul.f32 %v1313, %v1375
    %v1383 = vmul.f32 %v1314, %v1375
    %v1384 = vmul.f32 %v1315, %v1375
    %v1385 = vmul.f32 %v1316, %v1375
    %v1386 = vmul.f32 %v1317, %v1375
    %v1387 = vmul.f32 %v1318, %v1375
    %v1388 = vmul.f32 %v1319, %v1375
    %v1389 = vmul.f32 %v1320, %v1375
    %v1390 = vmul.f32 %v1321, %v1375
    %v1391 = vmul.f32 %v1322, %v1375
    %v1392 = vmul.f32 %v1323, %v1375
    %v1393 = vmul.f32 %v1324, %v1375
    %v1394 = vmul.f32 %v1325, %v1375
    %v1395 = vmul.f32 %v1326, %v1375
    %v1396 = vmul.f32 %v1327, %v1375
    %v1397 = vmul.f32 %v1328, %v1375
    %v1398 = vmul.f32 %v1329, %v1375
    %v1399 = vmul.f32 %v1330, %v1375
    %v1400 = vmul.f32 %v1331, %v1375
    %v1401 = vmul.f32 %v1332, %v1375
    %v1402 = vmul.f32 %v1333, %v1375
    %v1403 = vmul.f32 %v1334, %v1375
    %v1404 = vmul.f32 %v1335, %v1375
    %v1405 = vmul.f32 %v1336, %v1375
    %v1406 = vmul.f32 %v1337, %v1375
    %v1407 = vmul.f32 %v1338, %v1375
    %v1408 = vmul.f32 %v1339, %v1375
    %v1409 = vmul.f32 %v1340, %v1375
    %v1410 = vmul.f32 %v1341, %v1375
    %v1411 = vmul.f32 %v1342, %v1375
    %v1412 = vmul.f32 %v1343, %v1375
    %v1413 = vmul.f32 %v1344, %v1375
    %v1414 = vmul.f32 %v1345, %v1375
    %v1415 = vmul.f32 %v1346, %v1375
    %v1416 = vmul.f32 %v1347, %v1375
    %v1417 = vmul.f32 %v1348, %v1375
    %v1418 = vmul.f32 %v1349, %v1375
    %v1419 = vmul.f32 %v1350, %v1375
    %v1420 = vmul.f32 %v1351, %v1375
    %v1421 = vmul.f32 %v1352, %v1375
    %v1422 = vmul.f32 %v1353, %v1375
    %v1423 = vmul.f32 %v1354, %v1375
    %v1424 = vmul.f32 %v1355, %v1375
    %v1425 = vmul.f32 %v1356, %v1375
    %v1426 = vmul.f32 %v1357, %v1375
    %v1427 = vmul.f32 %v1358, %v1375
    %v1428 = vmul.f32 %v1359, %v1375
    %v1429 = vmul.f32 %v1360, %v1375
    %v1430 = vmul.f32 %v1361, %v1375
    %v1431 = vmul.f32 %v1362, %v1375
    %v1432 = vmul.f32 %v1363, %v1375
    %v1433 = vmul.f32 %v1364, %v1375
    %v1434 = vmul.f32 %v1365, %v1375
    %v1435 = vmul.f32 %v1366, %v1375
    %v1436 = vmul.f32 %v1367, %v1375
    %v1437 = vmul.f32 %v1368, %v1375
    %v1438 = vmul.f32 %v1369, %v1375
    %v1439 = vmul.f32 %v1370, %v1375
    %v1440 = vld [vmem:[%s2 + $0x2] sm:$0x1]
    %v1441 = vlaneseq
    %v1442 = vshrl.u32 %v1441, 7
    %v1443 = vsub.s32 0, %v1442
    %v1444 = vrot.slane %v1440, %v1443
    %v1445 = vadd.f32 %v1376, %v1444
    %v1446 = vadd.f32 %v1377, %v1444
    %v1447 = vadd.f32 %v1378, %v1444
    %v1448 = vadd.f32 %v1379, %v1444
    %v1449 = vadd.f32 %v1380, %v1444
    %v1450 = vadd.f32 %v1381, %v1444
    %v1451 = vadd.f32 %v1382, %v1444
    %v1452 = vadd.f32 %v1383, %v1444
    %v1453 = vadd.f32 %v1384, %v1444
    %v1454 = vadd.f32 %v1385, %v1444
    %v1455 = vadd.f32 %v1386, %v1444
    %v1456 = vadd.f32 %v1387, %v1444
    %v1457 = vadd.f32 %v1388, %v1444
    %v1458 = vadd.f32 %v1389, %v1444
    %v1459 = vadd.f32 %v1390, %v1444
    %v1460 = vadd.f32 %v1391, %v1444
    %v1461 = vadd.f32 %v1392, %v1444
    %v1462 = vadd.f32 %v1393, %v1444
    %v1463 = vadd.f32 %v1394, %v1444
    %v1464 = vadd.f32 %v1395, %v1444
    %v1465 = vadd.f32 %v1396, %v1444
    %v1466 = vadd.f32 %v1397, %v1444
    %v1467 = vadd.f32 %v1398, %v1444
    %v1468 = vadd.f32 %v1399, %v1444
    %v1469 = vadd.f32 %v1400, %v1444
    %v1470 = vadd.f32 %v1401, %v1444
    %v1471 = vadd.f32 %v1402, %v1444
    %v1472 = vadd.f32 %v1403, %v1444
    %v1473 = vadd.f32 %v1404, %v1444
    %v1474 = vadd.f32 %v1405, %v1444
    %v1475 = vadd.f32 %v1406, %v1444
    %v1476 = vadd.f32 %v1407, %v1444
    %v1477 = vadd.f32 %v1408, %v1444
    %v1478 = vadd.f32 %v1409, %v1444
    %v1479 = vadd.f32 %v1410, %v1444
    %v1480 = vadd.f32 %v1411, %v1444
    %v1481 = vadd.f32 %v1412, %v1444
    %v1482 = vadd.f32 %v1413, %v1444
    %v1483 = vadd.f32 %v1414, %v1444
    %v1484 = vadd.f32 %v1415, %v1444
    %v1485 = vadd.f32 %v1416, %v1444
    %v1486 = vadd.f32 %v1417, %v1444
    %v1487 = vadd.f32 %v1418, %v1444
    %v1488 = vadd.f32 %v1419, %v1444
    %v1489 = vadd.f32 %v1420, %v1444
    %v1490 = vadd.f32 %v1421, %v1444
    %v1491 = vadd.f32 %v1422, %v1444
    %v1492 = vadd.f32 %v1423, %v1444
    %v1493 = vadd.f32 %v1424, %v1444
    %v1494 = vadd.f32 %v1425, %v1444
    %v1495 = vadd.f32 %v1426, %v1444
    %v1496 = vadd.f32 %v1427, %v1444
    %v1497 = vadd.f32 %v1428, %v1444
    %v1498 = vadd.f32 %v1429, %v1444
    %v1499 = vadd.f32 %v1430, %v1444
    %v1500 = vadd.f32 %v1431, %v1444
    %v1501 = vadd.f32 %v1432, %v1444
    %v1502 = vadd.f32 %v1433, %v1444
    %v1503 = vadd.f32 %v1434, %v1444
    %v1504 = vadd.f32 %v1435, %v1444
    %v1505 = vadd.f32 %v1436, %v1444
    %v1506 = vadd.f32 %v1437, %v1444
    %v1507 = vadd.f32 %v1438, %v1444
    %v1508 = vadd.f32 %v1439, %v1444
    %1509 = vrot.lane.b32.xlu0 %v15, 32
    %v1510 = vpop.permute.xlu0 %1509
    %1511 = vrot.lane.b32.xlu0 %v16, 32
    %v1512 = vpop.permute.xlu0 %1511
    %1513 = vrot.lane.b32.xlu0 %v17, 32
    %v1514 = vpop.permute.xlu0 %1513
    %1515 = vrot.lane.b32.xlu0 %v18, 32
    %v1516 = vpop.permute.xlu0 %1515
    %1517 = vrot.lane.b32.xlu0 %v19, 32
    %v1518 = vpop.permute.xlu0 %1517
    %1519 = vrot.lane.b32.xlu0 %v20, 32
    %v1520 = vpop.permute.xlu0 %1519
    %1521 = vrot.lane.b32.xlu0 %v21, 32
    %v1522 = vpop.permute.xlu0 %1521
    %1523 = vrot.lane.b32.xlu0 %v22, 32
    %v1524 = vpop.permute.xlu0 %1523
    %1525 = vrot.lane.b32.xlu0 %v23, 32
    %v1526 = vpop.permute.xlu0 %1525
    %1527 = vrot.lane.b32.xlu0 %v24, 32
    %v1528 = vpop.permute.xlu0 %1527
    %1529 = vrot.lane.b32.xlu0 %v25, 32
    %v1530 = vpop.permute.xlu0 %1529
    %1531 = vrot.lane.b32.xlu0 %v26, 32
    %v1532 = vpop.permute.xlu0 %1531
    %1533 = vrot.lane.b32.xlu0 %v27, 32
    %v1534 = vpop.permute.xlu0 %1533
    %1535 = vrot.lane.b32.xlu0 %v28, 32
    %v1536 = vpop.permute.xlu0 %1535
    %1537 = vrot.lane.b32.xlu0 %v29, 32
    %v1538 = vpop.permute.xlu0 %1537
    %1539 = vrot.lane.b32.xlu0 %v30, 32
    %v1540 = vpop.permute.xlu0 %1539
    %1541 = vrot.lane.b32.xlu0 %v31, 32
    %v1542 = vpop.permute.xlu0 %1541
    %1543 = vrot.lane.b32.xlu0 %v32, 32
    %v1544 = vpop.permute.xlu0 %1543
    %1545 = vrot.lane.b32.xlu0 %v33, 32
    %v1546 = vpop.permute.xlu0 %1545
    %1547 = vrot.lane.b32.xlu0 %v34, 32
    %v1548 = vpop.permute.xlu0 %1547
    %1549 = vrot.lane.b32.xlu0 %v35, 32
    %v1550 = vpop.permute.xlu0 %1549
    %1551 = vrot.lane.b32.xlu0 %v36, 32
    %v1552 = vpop.permute.xlu0 %1551
    %1553 = vrot.lane.b32.xlu0 %v37, 32
    %v1554 = vpop.permute.xlu0 %1553
    %1555 = vrot.lane.b32.xlu0 %v38, 32
    %v1556 = vpop.permute.xlu0 %1555
    %1557 = vrot.lane.b32.xlu0 %v39, 32
    %v1558 = vpop.permute.xlu0 %1557
    %1559 = vrot.lane.b32.xlu0 %v40, 32
    %v1560 = vpop.permute.xlu0 %1559
    %1561 = vrot.lane.b32.xlu0 %v41, 32
    %v1562 = vpop.permute.xlu0 %1561
    %1563 = vrot.lane.b32.xlu0 %v42, 32
    %v1564 = vpop.permute.xlu0 %1563
    %1565 = vrot.lane.b32.xlu0 %v43, 32
    %v1566 = vpop.permute.xlu0 %1565
    %1567 = vrot.lane.b32.xlu0 %v44, 32
    %v1568 = vpop.permute.xlu0 %1567
    %1569 = vrot.lane.b32.xlu0 %v45, 32
    %v1570 = vpop.permute.xlu0 %1569
    %1571 = vrot.lane.b32.xlu0 %v46, 32
    %v1572 = vpop.permute.xlu0 %1571
    %1573 = vrot.lane.b32.xlu0 %v47, 32
    %v1574 = vpop.permute.xlu0 %1573
    %1575 = vrot.lane.b32.xlu0 %v48, 32
    %v1576 = vpop.permute.xlu0 %1575
    %1577 = vrot.lane.b32.xlu0 %v49, 32
    %v1578 = vpop.permute.xlu0 %1577
    %1579 = vrot.lane.b32.xlu0 %v50, 32
    %v1580 = vpop.permute.xlu0 %1579
    %1581 = vrot.lane.b32.xlu0 %v51, 32
    %v1582 = vpop.permute.xlu0 %1581
    %1583 = vrot.lane.b32.xlu0 %v52, 32
    %v1584 = vpop.permute.xlu0 %1583
    %1585 = vrot.lane.b32.xlu0 %v53, 32
    %v1586 = vpop.permute.xlu0 %1585
    %1587 = vrot.lane.b32.xlu0 %v54, 32
    %v1588 = vpop.permute.xlu0 %1587
    %1589 = vrot.lane.b32.xlu0 %v55, 32
    %v1590 = vpop.permute.xlu0 %1589
    %1591 = vrot.lane.b32.xlu0 %v56, 32
    %v1592 = vpop.permute.xlu0 %1591
    %1593 = vrot.lane.b32.xlu0 %v57, 32
    %v1594 = vpop.permute.xlu0 %1593
    %1595 = vrot.lane.b32.xlu0 %v58, 32
    %v1596 = vpop.permute.xlu0 %1595
    %1597 = vrot.lane.b32.xlu0 %v59, 32
    %v1598 = vpop.permute.xlu0 %1597
    %1599 = vrot.lane.b32.xlu0 %v60, 32
    %v1600 = vpop.permute.xlu0 %1599
    %1601 = vrot.lane.b32.xlu0 %v61, 32
    %v1602 = vpop.permute.xlu0 %1601
    %1603 = vrot.lane.b32.xlu0 %v62, 32
    %v1604 = vpop.permute.xlu0 %1603
    %1605 = vrot.lane.b32.xlu0 %v63, 32
    %v1606 = vpop.permute.xlu0 %1605
    %1607 = vrot.lane.b32.xlu0 %v64, 32
    %v1608 = vpop.permute.xlu0 %1607
    %1609 = vrot.lane.b32.xlu0 %v65, 32
    %v1610 = vpop.permute.xlu0 %1609
    %1611 = vrot.lane.b32.xlu0 %v66, 32
    %v1612 = vpop.permute.xlu0 %1611
    %1613 = vrot.lane.b32.xlu0 %v67, 32
    %v1614 = vpop.permute.xlu0 %1613
    %1615 = vrot.lane.b32.xlu0 %v68, 32
    %v1616 = vpop.permute.xlu0 %1615
    %1617 = vrot.lane.b32.xlu0 %v69, 32
    %v1618 = vpop.permute.xlu0 %1617
    %1619 = vrot.lane.b32.xlu0 %v70, 32
    %v1620 = vpop.permute.xlu0 %1619
    %1621 = vrot.lane.b32.xlu0 %v71, 32
    %v1622 = vpop.permute.xlu0 %1621
    %1623 = vrot.lane.b32.xlu0 %v72, 32
    %v1624 = vpop.permute.xlu0 %1623
    %1625 = vrot.lane.b32.xlu0 %v73, 32
    %v1626 = vpop.permute.xlu0 %1625
    %1627 = vrot.lane.b32.xlu0 %v74, 32
    %v1628 = vpop.permute.xlu0 %1627
    %1629 = vrot.lane.b32.xlu0 %v75, 32
    %v1630 = vpop.permute.xlu0 %1629
    %1631 = vrot.lane.b32.xlu0 %v76, 32
    %v1632 = vpop.permute.xlu0 %1631
    %1633 = vrot.lane.b32.xlu0 %v77, 32
    %v1634 = vpop.permute.xlu0 %1633
    %1635 = vrot.lane.b32.xlu0 %v78, 32
    %v1636 = vpop.permute.xlu0 %1635
    %1701 = vrot.lane.b32.xlu0 %v15, 64
    %v1702 = vpop.permute.xlu0 %1701
    %1703 = vrot.lane.b32.xlu0 %v16, 64
    %v1704 = vpop.permute.xlu0 %1703
    %1705 = vrot.lane.b32.xlu0 %v17, 64
    %v1706 = vpop.permute.xlu0 %1705
    %1707 = vrot.lane.b32.xlu0 %v18, 64
    %v1708 = vpop.permute.xlu0 %1707
    %1709 = vrot.lane.b32.xlu0 %v19, 64
    %v1710 = vpop.permute.xlu0 %1709
    %1711 = vrot.lane.b32.xlu0 %v20, 64
    %v1712 = vpop.permute.xlu0 %1711
    %1713 = vrot.lane.b32.xlu0 %v21, 64
    %v1714 = vpop.permute.xlu0 %1713
    %1715 = vrot.lane.b32.xlu0 %v22, 64
    %v1716 = vpop.permute.xlu0 %1715
    %1717 = vrot.lane.b32.xlu0 %v23, 64
    %v1718 = vpop.permute.xlu0 %1717
    %1719 = vrot.lane.b32.xlu0 %v24, 64
    %v1720 = vpop.permute.xlu0 %1719
    %1721 = vrot.lane.b32.xlu0 %v25, 64
    %v1722 = vpop.permute.xlu0 %1721
    %1723 = vrot.lane.b32.xlu0 %v26, 64
    %v1724 = vpop.permute.xlu0 %1723
    %1725 = vrot.lane.b32.xlu0 %v27, 64
    %v1726 = vpop.permute.xlu0 %1725
    %1727 = vrot.lane.b32.xlu0 %v28, 64
    %v1728 = vpop.permute.xlu0 %1727
    %1729 = vrot.lane.b32.xlu0 %v29, 64
    %v1730 = vpop.permute.xlu0 %1729
    %1731 = vrot.lane.b32.xlu0 %v30, 64
    %v1732 = vpop.permute.xlu0 %1731
    %1733 = vrot.lane.b32.xlu0 %v31, 64
    %v1734 = vpop.permute.xlu0 %1733
    %1735 = vrot.lane.b32.xlu0 %v32, 64
    %v1736 = vpop.permute.xlu0 %1735
    %1737 = vrot.lane.b32.xlu0 %v33, 64
    %v1738 = vpop.permute.xlu0 %1737
    %1739 = vrot.lane.b32.xlu0 %v34, 64
    %v1740 = vpop.permute.xlu0 %1739
    %1741 = vrot.lane.b32.xlu0 %v35, 64
    %v1742 = vpop.permute.xlu0 %1741
    %1743 = vrot.lane.b32.xlu0 %v36, 64
    %v1744 = vpop.permute.xlu0 %1743
    %1745 = vrot.lane.b32.xlu0 %v37, 64
    %v1746 = vpop.permute.xlu0 %1745
    %1747 = vrot.lane.b32.xlu0 %v38, 64
    %v1748 = vpop.permute.xlu0 %1747
    %1749 = vrot.lane.b32.xlu0 %v39, 64
    %v1750 = vpop.permute.xlu0 %1749
    %1751 = vrot.lane.b32.xlu0 %v40, 64
    %v1752 = vpop.permute.xlu0 %1751
    %1753 = vrot.lane.b32.xlu0 %v41, 64
    %v1754 = vpop.permute.xlu0 %1753
    %1755 = vrot.lane.b32.xlu0 %v42, 64
    %v1756 = vpop.permute.xlu0 %1755
    %1757 = vrot.lane.b32.xlu0 %v43, 64
    %v1758 = vpop.permute.xlu0 %1757
    %1759 = vrot.lane.b32.xlu0 %v44, 64
    %v1760 = vpop.permute.xlu0 %1759
    %1761 = vrot.lane.b32.xlu0 %v45, 64
    %v1762 = vpop.permute.xlu0 %1761
    %1763 = vrot.lane.b32.xlu0 %v46, 64
    %v1764 = vpop.permute.xlu0 %1763
    %1765 = vrot.lane.b32.xlu0 %v47, 64
    %v1766 = vpop.permute.xlu0 %1765
    %1767 = vrot.lane.b32.xlu0 %v48, 64
    %v1768 = vpop.permute.xlu0 %1767
    %1769 = vrot.lane.b32.xlu0 %v49, 64
    %v1770 = vpop.permute.xlu0 %1769
    %1771 = vrot.lane.b32.xlu0 %v50, 64
    %v1772 = vpop.permute.xlu0 %1771
    %1773 = vrot.lane.b32.xlu0 %v51, 64
    %v1774 = vpop.permute.xlu0 %1773
    %1775 = vrot.lane.b32.xlu0 %v52, 64
    %v1776 = vpop.permute.xlu0 %1775
    %1777 = vrot.lane.b32.xlu0 %v53, 64
    %v1778 = vpop.permute.xlu0 %1777
    %1779 = vrot.lane.b32.xlu0 %v54, 64
    %v1780 = vpop.permute.xlu0 %1779
    %1781 = vrot.lane.b32.xlu0 %v55, 64
    %v1782 = vpop.permute.xlu0 %1781
    %1783 = vrot.lane.b32.xlu0 %v56, 64
    %v1784 = vpop.permute.xlu0 %1783
    %1785 = vrot.lane.b32.xlu0 %v57, 64
    %v1786 = vpop.permute.xlu0 %1785
    %1787 = vrot.lane.b32.xlu0 %v58, 64
    %v1788 = vpop.permute.xlu0 %1787
    %1789 = vrot.lane.b32.xlu0 %v59, 64
    %v1790 = vpop.permute.xlu0 %1789
    %1791 = vrot.lane.b32.xlu0 %v60, 64
    %v1792 = vpop.permute.xlu0 %1791
    %1793 = vrot.lane.b32.xlu0 %v61, 64
    %v1794 = vpop.permute.xlu0 %1793
    %1795 = vrot.lane.b32.xlu0 %v62, 64
    %v1796 = vpop.permute.xlu0 %1795
    %1797 = vrot.lane.b32.xlu0 %v63, 64
    %v1798 = vpop.permute.xlu0 %1797
    %1799 = vrot.lane.b32.xlu0 %v64, 64
    %v1800 = vpop.permute.xlu0 %1799
    %1801 = vrot.lane.b32.xlu0 %v65, 64
    %v1802 = vpop.permute.xlu0 %1801
    %1803 = vrot.lane.b32.xlu0 %v66, 64
    %v1804 = vpop.permute.xlu0 %1803
    %1805 = vrot.lane.b32.xlu0 %v67, 64
    %v1806 = vpop.permute.xlu0 %1805
    %1807 = vrot.lane.b32.xlu0 %v68, 64
    %v1808 = vpop.permute.xlu0 %1807
    %1809 = vrot.lane.b32.xlu0 %v69, 64
    %v1810 = vpop.permute.xlu0 %1809
    %1811 = vrot.lane.b32.xlu0 %v70, 64
    %v1812 = vpop.permute.xlu0 %1811
    %1813 = vrot.lane.b32.xlu0 %v71, 64
    %v1814 = vpop.permute.xlu0 %1813
    %1815 = vrot.lane.b32.xlu0 %v72, 64
    %v1816 = vpop.permute.xlu0 %1815
    %1817 = vrot.lane.b32.xlu0 %v73, 64
    %v1818 = vpop.permute.xlu0 %1817
    %1819 = vrot.lane.b32.xlu0 %v74, 64
    %v1820 = vpop.permute.xlu0 %1819
    %1821 = vrot.lane.b32.xlu0 %v75, 64
    %v1822 = vpop.permute.xlu0 %1821
    %1823 = vrot.lane.b32.xlu0 %v76, 64
    %v1824 = vpop.permute.xlu0 %1823
    %1825 = vrot.lane.b32.xlu0 %v77, 64
    %v1826 = vpop.permute.xlu0 %1825
    %1827 = vrot.lane.b32.xlu0 %v78, 64
    %v1828 = vpop.permute.xlu0 %1827
    %1893 = vrot.lane.b32.xlu0 %v15, 96
    %v1894 = vpop.permute.xlu0 %1893
    %1895 = vrot.lane.b32.xlu0 %v16, 96
    %v1896 = vpop.permute.xlu0 %1895
    %1897 = vrot.lane.b32.xlu0 %v17, 96
    %v1898 = vpop.permute.xlu0 %1897
    %1899 = vrot.lane.b32.xlu0 %v18, 96
    %v1900 = vpop.permute.xlu0 %1899
    %1901 = vrot.lane.b32.xlu0 %v19, 96
    %v1902 = vpop.permute.xlu0 %1901
    %1903 = vrot.lane.b32.xlu0 %v20, 96
    %v1904 = vpop.permute.xlu0 %1903
    %1905 = vrot.lane.b32.xlu0 %v21, 96
    %v1906 = vpop.permute.xlu0 %1905
    %1907 = vrot.lane.b32.xlu0 %v22, 96
    %v1908 = vpop.permute.xlu0 %1907
    %1909 = vrot.lane.b32.xlu0 %v23, 96
    %v1910 = vpop.permute.xlu0 %1909
    %1911 = vrot.lane.b32.xlu0 %v24, 96
    %v1912 = vpop.permute.xlu0 %1911
    %1913 = vrot.lane.b32.xlu0 %v25, 96
    %v1914 = vpop.permute.xlu0 %1913
    %1915 = vrot.lane.b32.xlu0 %v26, 96
    %v1916 = vpop.permute.xlu0 %1915
    %1917 = vrot.lane.b32.xlu0 %v27, 96
    %v1918 = vpop.permute.xlu0 %1917
    %1919 = vrot.lane.b32.xlu0 %v28, 96
    %v1920 = vpop.permute.xlu0 %1919
    %1921 = vrot.lane.b32.xlu0 %v29, 96
    %v1922 = vpop.permute.xlu0 %1921
    %1923 = vrot.lane.b32.xlu0 %v30, 96
    %v1924 = vpop.permute.xlu0 %1923
    %1925 = vrot.lane.b32.xlu0 %v31, 96
    %v1926 = vpop.permute.xlu0 %1925
    %1927 = vrot.lane.b32.xlu0 %v32, 96
    %v1928 = vpop.permute.xlu0 %1927
    %1929 = vrot.lane.b32.xlu0 %v33, 96
    %v1930 = vpop.permute.xlu0 %1929
    %1931 = vrot.lane.b32.xlu0 %v34, 96
    %v1932 = vpop.permute.xlu0 %1931
    %1933 = vrot.lane.b32.xlu0 %v35, 96
    %v1934 = vpop.permute.xlu0 %1933
    %1935 = vrot.lane.b32.xlu0 %v36, 96
    %v1936 = vpop.permute.xlu0 %1935
    %1937 = vrot.lane.b32.xlu0 %v37, 96
    %v1938 = vpop.permute.xlu0 %1937
    %1939 = vrot.lane.b32.xlu0 %v38, 96
    %v1940 = vpop.permute.xlu0 %1939
    %1941 = vrot.lane.b32.xlu0 %v39, 96
    %v1942 = vpop.permute.xlu0 %1941
    %1943 = vrot.lane.b32.xlu0 %v40, 96
    %v1944 = vpop.permute.xlu0 %1943
    %1945 = vrot.lane.b32.xlu0 %v41, 96
    %v1946 = vpop.permute.xlu0 %1945
    %1947 = vrot.lane.b32.xlu0 %v42, 96
    %v1948 = vpop.permute.xlu0 %1947
    %1949 = vrot.lane.b32.xlu0 %v43, 96
    %v1950 = vpop.permute.xlu0 %1949
    %1951 = vrot.lane.b32.xlu0 %v44, 96
    %v1952 = vpop.permute.xlu0 %1951
    %1953 = vrot.lane.b32.xlu0 %v45, 96
    %v1954 = vpop.permute.xlu0 %1953
    %1955 = vrot.lane.b32.xlu0 %v46, 96
    %v1956 = vpop.permute.xlu0 %1955
    %1957 = vrot.lane.b32.xlu0 %v47, 96
    %v1958 = vpop.permute.xlu0 %1957
    %1959 = vrot.lane.b32.xlu0 %v48, 96
    %v1960 = vpop.permute.xlu0 %1959
    %1961 = vrot.lane.b32.xlu0 %v49, 96
    %v1962 = vpop.permute.xlu0 %1961
    %1963 = vrot.lane.b32.xlu0 %v50, 96
    %v1964 = vpop.permute.xlu0 %1963
    %1965 = vrot.lane.b32.xlu0 %v51, 96
    %v1966 = vpop.permute.xlu0 %1965
    %1967 = vrot.lane.b32.xlu0 %v52, 96
    %v1968 = vpop.permute.xlu0 %1967
    %1969 = vrot.lane.b32.xlu0 %v53, 96
    %v1970 = vpop.permute.xlu0 %1969
    %1971 = vrot.lane.b32.xlu0 %v54, 96
    %v1972 = vpop.permute.xlu0 %1971
    %1973 = vrot.lane.b32.xlu0 %v55, 96
    %v1974 = vpop.permute.xlu0 %1973
    %1975 = vrot.lane.b32.xlu0 %v56, 96
    %v1976 = vpop.permute.xlu0 %1975
    %1977 = vrot.lane.b32.xlu0 %v57, 96
    %v1978 = vpop.permute.xlu0 %1977
    %1979 = vrot.lane.b32.xlu0 %v58, 96
    %v1980 = vpop.permute.xlu0 %1979
    %1981 = vrot.lane.b32.xlu0 %v59, 96
    %v1982 = vpop.permute.xlu0 %1981
    %1983 = vrot.lane.b32.xlu0 %v60, 96
    %v1984 = vpop.permute.xlu0 %1983
    %1985 = vrot.lane.b32.xlu0 %v61, 96
    %v1986 = vpop.permute.xlu0 %1985
    %1987 = vrot.lane.b32.xlu0 %v62, 96
    %v1988 = vpop.permute.xlu0 %1987
    %1989 = vrot.lane.b32.xlu0 %v63, 96
    %v1990 = vpop.permute.xlu0 %1989
    %1991 = vrot.lane.b32.xlu0 %v64, 96
    %v1992 = vpop.permute.xlu0 %1991
    %1993 = vrot.lane.b32.xlu0 %v65, 96
    %v1994 = vpop.permute.xlu0 %1993
    %1995 = vrot.lane.b32.xlu0 %v66, 96
    %v1996 = vpop.permute.xlu0 %1995
    %1997 = vrot.lane.b32.xlu0 %v67, 96
    %v1998 = vpop.permute.xlu0 %1997
    %1999 = vrot.lane.b32.xlu0 %v68, 96
    %v2000 = vpop.permute.xlu0 %1999
    %2001 = vrot.lane.b32.xlu0 %v69, 96
    %v2002 = vpop.permute.xlu0 %2001
    %2003 = vrot.lane.b32.xlu0 %v70, 96
    %v2004 = vpop.permute.xlu0 %2003
    %2005 = vrot.lane.b32.xlu0 %v71, 96
    %v2006 = vpop.permute.xlu0 %2005
    %2007 = vrot.lane.b32.xlu0 %v72, 96
    %v2008 = vpop.permute.xlu0 %2007
    %2009 = vrot.lane.b32.xlu0 %v73, 96
    %v2010 = vpop.permute.xlu0 %2009
    %2011 = vrot.lane.b32.xlu0 %v74, 96
    %v2012 = vpop.permute.xlu0 %2011
    %2013 = vrot.lane.b32.xlu0 %v75, 96
    %v2014 = vpop.permute.xlu0 %2013
    %2015 = vrot.lane.b32.xlu0 %v76, 96
    %v2016 = vpop.permute.xlu0 %2015
    %2017 = vrot.lane.b32.xlu0 %v77, 96
    %v2018 = vpop.permute.xlu0 %2017
    %2019 = vrot.lane.b32.xlu0 %v78, 96
    %v2020 = vpop.permute.xlu0 %2019
    %v2085 = vsel %vm88, %v15, %v1510
    %v2086 = vsel %vm88, %v16, %v1512
    %v2087 = vsel %vm88, %v17, %v1514
    %v2088 = vsel %vm88, %v18, %v1516
    %v2089 = vsel %vm88, %v19, %v1518
    %v2090 = vsel %vm88, %v20, %v1520
    %v2091 = vsel %vm88, %v21, %v1522
    %v2092 = vsel %vm88, %v22, %v1524
    %v2093 = vsel %vm88, %v23, %v1526
    %v2094 = vsel %vm88, %v24, %v1528
    %v2095 = vsel %vm88, %v25, %v1530
    %v2096 = vsel %vm88, %v26, %v1532
    %v2097 = vsel %vm88, %v27, %v1534
    %v2098 = vsel %vm88, %v28, %v1536
    %v2099 = vsel %vm88, %v29, %v1538
    %v2100 = vsel %vm88, %v30, %v1540
    %v2101 = vsel %vm88, %v31, %v1542
    %v2102 = vsel %vm88, %v32, %v1544
    %v2103 = vsel %vm88, %v33, %v1546
    %v2104 = vsel %vm88, %v34, %v1548
    %v2105 = vsel %vm88, %v35, %v1550
    %v2106 = vsel %vm88, %v36, %v1552
    %v2107 = vsel %vm88, %v37, %v1554
    %v2108 = vsel %vm88, %v38, %v1556
    %v2109 = vsel %vm88, %v39, %v1558
    %v2110 = vsel %vm88, %v40, %v1560
    %v2111 = vsel %vm88, %v41, %v1562
    %v2112 = vsel %vm88, %v42, %v1564
    %v2113 = vsel %vm88, %v43, %v1566
    %v2114 = vsel %vm88, %v44, %v1568
    %v2115 = vsel %vm88, %v45, %v1570
    %v2116 = vsel %vm88, %v46, %v1572
    %v2117 = vsel %vm88, %v47, %v1574
    %v2118 = vsel %vm88, %v48, %v1576
    %v2119 = vsel %vm88, %v49, %v1578
    %v2120 = vsel %vm88, %v50, %v1580
    %v2121 = vsel %vm88, %v51, %v1582
    %v2122 = vsel %vm88, %v52, %v1584
    %v2123 = vsel %vm88, %v53, %v1586
    %v2124 = vsel %vm88, %v54, %v1588
    %v2125 = vsel %vm88, %v55, %v1590
    %v2126 = vsel %vm88, %v56, %v1592
    %v2127 = vsel %vm88, %v57, %v1594
    %v2128 = vsel %vm88, %v58, %v1596
    %v2129 = vsel %vm88, %v59, %v1598
    %v2130 = vsel %vm88, %v60, %v1600
    %v2131 = vsel %vm88, %v61, %v1602
    %v2132 = vsel %vm88, %v62, %v1604
    %v2133 = vsel %vm88, %v63, %v1606
    %v2134 = vsel %vm88, %v64, %v1608
    %v2135 = vsel %vm88, %v65, %v1610
    %v2136 = vsel %vm88, %v66, %v1612
    %v2137 = vsel %vm88, %v67, %v1614
    %v2138 = vsel %vm88, %v68, %v1616
    %v2139 = vsel %vm88, %v69, %v1618
    %v2140 = vsel %vm88, %v70, %v1620
    %v2141 = vsel %vm88, %v71, %v1622
    %v2142 = vsel %vm88, %v72, %v1624
    %v2143 = vsel %vm88, %v73, %v1626
    %v2144 = vsel %vm88, %v74, %v1628
    %v2145 = vsel %vm88, %v75, %v1630
    %v2146 = vsel %vm88, %v76, %v1632
    %v2147 = vsel %vm88, %v77, %v1634
    %v2148 = vsel %vm88, %v78, %v1636
    %vm2149 = vcmask 523264
    %v2150 = vsel %vm2149, %v2085, %v1702
    %v2151 = vsel %vm2149, %v2086, %v1704
    %v2152 = vsel %vm2149, %v2087, %v1706
    %v2153 = vsel %vm2149, %v2088, %v1708
    %v2154 = vsel %vm2149, %v2089, %v1710
    %v2155 = vsel %vm2149, %v2090, %v1712
    %v2156 = vsel %vm2149, %v2091, %v1714
    %v2157 = vsel %vm2149, %v2092, %v1716
    %v2158 = vsel %vm2149, %v2093, %v1718
    %v2159 = vsel %vm2149, %v2094, %v1720
    %v2160 = vsel %vm2149, %v2095, %v1722
    %v2161 = vsel %vm2149, %v2096, %v1724
    %v2162 = vsel %vm2149, %v2097, %v1726
    %v2163 = vsel %vm2149, %v2098, %v1728
    %v2164 = vsel %vm2149, %v2099, %v1730
    %v2165 = vsel %vm2149, %v2100, %v1732
    %v2166 = vsel %vm2149, %v2101, %v1734
    %v2167 = vsel %vm2149, %v2102, %v1736
    %v2168 = vsel %vm2149, %v2103, %v1738
    %v2169 = vsel %vm2149, %v2104, %v1740
    %v2170 = vsel %vm2149, %v2105, %v1742
    %v2171 = vsel %vm2149, %v2106, %v1744
    %v2172 = vsel %vm2149, %v2107, %v1746
    %v2173 = vsel %vm2149, %v2108, %v1748
    %v2174 = vsel %vm2149, %v2109, %v1750
    %v2175 = vsel %vm2149, %v2110, %v1752
    %v2176 = vsel %vm2149, %v2111, %v1754
    %v2177 = vsel %vm2149, %v2112, %v1756
    %v2178 = vsel %vm2149, %v2113, %v1758
    %v2179 = vsel %vm2149, %v2114, %v1760
    %v2180 = vsel %vm2149, %v2115, %v1762
    %v2181 = vsel %vm2149, %v2116, %v1764
    %v2182 = vsel %vm2149, %v2117, %v1766
    %v2183 = vsel %vm2149, %v2118, %v1768
    %v2184 = vsel %vm2149, %v2119, %v1770
    %v2185 = vsel %vm2149, %v2120, %v1772
    %v2186 = vsel %vm2149, %v2121, %v1774
    %v2187 = vsel %vm2149, %v2122, %v1776
    %v2188 = vsel %vm2149, %v2123, %v1778
    %v2189 = vsel %vm2149, %v2124, %v1780
    %v2190 = vsel %vm2149, %v2125, %v1782
    %v2191 = vsel %vm2149, %v2126, %v1784
    %v2192 = vsel %vm2149, %v2127, %v1786
    %v2193 = vsel %vm2149, %v2128, %v1788
    %v2194 = vsel %vm2149, %v2129, %v1790
    %v2195 = vsel %vm2149, %v2130, %v1792
    %v2196 = vsel %vm2149, %v2131, %v1794
    %v2197 = vsel %vm2149, %v2132, %v1796
    %v2198 = vsel %vm2149, %v2133, %v1798
    %v2199 = vsel %vm2149, %v2134, %v1800
    %v2200 = vsel %vm2149, %v2135, %v1802
    %v2201 = vsel %vm2149, %v2136, %v1804
    %v2202 = vsel %vm2149, %v2137, %v1806
    %v2203 = vsel %vm2149, %v2138, %v1808
    %v2204 = vsel %vm2149, %v2139, %v1810
    %v2205 = vsel %vm2149, %v2140, %v1812
    %v2206 = vsel %vm2149, %v2141, %v1814
    %v2207 = vsel %vm2149, %v2142, %v1816
    %v2208 = vsel %vm2149, %v2143, %v1818
    %v2209 = vsel %vm2149, %v2144, %v1820
    %v2210 = vsel %vm2149, %v2145, %v1822
    %v2211 = vsel %vm2149, %v2146, %v1824
    %v2212 = vsel %vm2149, %v2147, %v1826
    %v2213 = vsel %vm2149, %v2148, %v1828
    %vm2214 = vcmask 785408
    %v2215 = vsel %vm2214, %v2150, %v1894
    %v2216 = vsel %vm2214, %v2151, %v1896
    %v2217 = vsel %vm2214, %v2152, %v1898
    %v2218 = vsel %vm2214, %v2153, %v1900
    %v2219 = vsel %vm2214, %v2154, %v1902
    %v2220 = vsel %vm2214, %v2155, %v1904
    %v2221 = vsel %vm2214, %v2156, %v1906
    %v2222 = vsel %vm2214, %v2157, %v1908
    %v2223 = vsel %vm2214, %v2158, %v1910
    %v2224 = vsel %vm2214, %v2159, %v1912
    %v2225 = vsel %vm2214, %v2160, %v1914
    %v2226 = vsel %vm2214, %v2161, %v1916
    %v2227 = vsel %vm2214, %v2162, %v1918
    %v2228 = vsel %vm2214, %v2163, %v1920
    %v2229 = vsel %vm2214, %v2164, %v1922
    %v2230 = vsel %vm2214, %v2165, %v1924
    %v2231 = vsel %vm2214, %v2166, %v1926
    %v2232 = vsel %vm2214, %v2167, %v1928
    %v2233 = vsel %vm2214, %v2168, %v1930
    %v2234 = vsel %vm2214, %v2169, %v1932
    %v2235 = vsel %vm2214, %v2170, %v1934
    %v2236 = vsel %vm2214, %v2171, %v1936
    %v2237 = vsel %vm2214, %v2172, %v1938
    %v2238 = vsel %vm2214, %v2173, %v1940
    %v2239 = vsel %vm2214, %v2174, %v1942
    %v2240 = vsel %vm2214, %v2175, %v1944
    %v2241 = vsel %vm2214, %v2176, %v1946
    %v2242 = vsel %vm2214, %v2177, %v1948
    %v2243 = vsel %vm2214, %v2178, %v1950
    %v2244 = vsel %vm2214, %v2179, %v1952
    %v2245 = vsel %vm2214, %v2180, %v1954
    %v2246 = vsel %vm2214, %v2181, %v1956
    %v2247 = vsel %vm2214, %v2182, %v1958
    %v2248 = vsel %vm2214, %v2183, %v1960
    %v2249 = vsel %vm2214, %v2184, %v1962
    %v2250 = vsel %vm2214, %v2185, %v1964
    %v2251 = vsel %vm2214, %v2186, %v1966
    %v2252 = vsel %vm2214, %v2187, %v1968
    %v2253 = vsel %vm2214, %v2188, %v1970
    %v2254 = vsel %vm2214, %v2189, %v1972
    %v2255 = vsel %vm2214, %v2190, %v1974
    %v2256 = vsel %vm2214, %v2191, %v1976
    %v2257 = vsel %vm2214, %v2192, %v1978
    %v2258 = vsel %vm2214, %v2193, %v1980
    %v2259 = vsel %vm2214, %v2194, %v1982
    %v2260 = vsel %vm2214, %v2195, %v1984
    %v2261 = vsel %vm2214, %v2196, %v1986
    %v2262 = vsel %vm2214, %v2197, %v1988
    %v2263 = vsel %vm2214, %v2198, %v1990
    %v2264 = vsel %vm2214, %v2199, %v1992
    %v2265 = vsel %vm2214, %v2200, %v1994
    %v2266 = vsel %vm2214, %v2201, %v1996
    %v2267 = vsel %vm2214, %v2202, %v1998
    %v2268 = vsel %vm2214, %v2203, %v2000
    %v2269 = vsel %vm2214, %v2204, %v2002
    %v2270 = vsel %vm2214, %v2205, %v2004
    %v2271 = vsel %vm2214, %v2206, %v2006
    %v2272 = vsel %vm2214, %v2207, %v2008
    %v2273 = vsel %vm2214, %v2208, %v2010
    %v2274 = vsel %vm2214, %v2209, %v2012
    %v2275 = vsel %vm2214, %v2210, %v2014
    %v2276 = vsel %vm2214, %v2211, %v2016
    %v2277 = vsel %vm2214, %v2212, %v2018
    %v2278 = vsel %vm2214, %v2213, %v2020
    %v2279 = vadd.f32 %v1445, %v2215
    %v2280 = vadd.f32 %v1446, %v2216
    %v2281 = vadd.f32 %v1447, %v2217
    %v2282 = vadd.f32 %v1448, %v2218
    %v2283 = vadd.f32 %v1449, %v2219
    %v2284 = vadd.f32 %v1450, %v2220
    %v2285 = vadd.f32 %v1451, %v2221
    %v2286 = vadd.f32 %v1452, %v2222
    %v2287 = vadd.f32 %v1453, %v2223
    %v2288 = vadd.f32 %v1454, %v2224
    %v2289 = vadd.f32 %v1455, %v2225
    %v2290 = vadd.f32 %v1456, %v2226
    %v2291 = vadd.f32 %v1457, %v2227
    %v2292 = vadd.f32 %v1458, %v2228
    %v2293 = vadd.f32 %v1459, %v2229
    %v2294 = vadd.f32 %v1460, %v2230
    %v2295 = vadd.f32 %v1461, %v2231
    %v2296 = vadd.f32 %v1462, %v2232
    %v2297 = vadd.f32 %v1463, %v2233
    %v2298 = vadd.f32 %v1464, %v2234
    %v2299 = vadd.f32 %v1465, %v2235
    %v2300 = vadd.f32 %v1466, %v2236
    %v2301 = vadd.f32 %v1467, %v2237
    %v2302 = vadd.f32 %v1468, %v2238
    %v2303 = vadd.f32 %v1469, %v2239
    %v2304 = vadd.f32 %v1470, %v2240
    %v2305 = vadd.f32 %v1471, %v2241
    %v2306 = vadd.f32 %v1472, %v2242
    %v2307 = vadd.f32 %v1473, %v2243
    %v2308 = vadd.f32 %v1474, %v2244
    %v2309 = vadd.f32 %v1475, %v2245
    %v2310 = vadd.f32 %v1476, %v2246
    %v2311 = vadd.f32 %v1477, %v2247
    %v2312 = vadd.f32 %v1478, %v2248
    %v2313 = vadd.f32 %v1479, %v2249
    %v2314 = vadd.f32 %v1480, %v2250
    %v2315 = vadd.f32 %v1481, %v2251
    %v2316 = vadd.f32 %v1482, %v2252
    %v2317 = vadd.f32 %v1483, %v2253
    %v2318 = vadd.f32 %v1484, %v2254
    %v2319 = vadd.f32 %v1485, %v2255
    %v2320 = vadd.f32 %v1486, %v2256
    %v2321 = vadd.f32 %v1487, %v2257
    %v2322 = vadd.f32 %v1488, %v2258
    %v2323 = vadd.f32 %v1489, %v2259
    %v2324 = vadd.f32 %v1490, %v2260
    %v2325 = vadd.f32 %v1491, %v2261
    %v2326 = vadd.f32 %v1492, %v2262
    %v2327 = vadd.f32 %v1493, %v2263
    %v2328 = vadd.f32 %v1494, %v2264
    %v2329 = vadd.f32 %v1495, %v2265
    %v2330 = vadd.f32 %v1496, %v2266
    %v2331 = vadd.f32 %v1497, %v2267
    %v2332 = vadd.f32 %v1498, %v2268
    %v2333 = vadd.f32 %v1499, %v2269
    %v2334 = vadd.f32 %v1500, %v2270
    %v2335 = vadd.f32 %v1501, %v2271
    %v2336 = vadd.f32 %v1502, %v2272
    %v2337 = vadd.f32 %v1503, %v2273
    %v2338 = vadd.f32 %v1504, %v2274
    %v2339 = vadd.f32 %v1505, %v2275
    %v2340 = vadd.f32 %v1506, %v2276
    %v2341 = vadd.f32 %v1507, %v2277
    %v2342 = vadd.f32 %v1508, %v2278
    %vm2343 = vcmp.ge.f32.partialorder %v2279, 0.0
    %vm2344 = vcmp.ge.f32.partialorder %v2280, 0.0
    %vm2345 = vcmp.ge.f32.partialorder %v2281, 0.0
    %vm2346 = vcmp.ge.f32.partialorder %v2282, 0.0
    %vm2347 = vcmp.ge.f32.partialorder %v2283, 0.0
    %vm2348 = vcmp.ge.f32.partialorder %v2284, 0.0
    %vm2349 = vcmp.ge.f32.partialorder %v2285, 0.0
    %vm2350 = vcmp.ge.f32.partialorder %v2286, 0.0
    %vm2351 = vcmp.ge.f32.partialorder %v2287, 0.0
    %vm2352 = vcmp.ge.f32.partialorder %v2288, 0.0
    %vm2353 = vcmp.ge.f32.partialorder %v2289, 0.0
    %vm2354 = vcmp.ge.f32.partialorder %v2290, 0.0
    %vm2355 = vcmp.ge.f32.partialorder %v2291, 0.0
    %vm2356 = vcmp.ge.f32.partialorder %v2292, 0.0
    %vm2357 = vcmp.ge.f32.partialorder %v2293, 0.0
    %vm2358 = vcmp.ge.f32.partialorder %v2294, 0.0
    %vm2359 = vcmp.ge.f32.partialorder %v2295, 0.0
    %vm2360 = vcmp.ge.f32.partialorder %v2296, 0.0
    %vm2361 = vcmp.ge.f32.partialorder %v2297, 0.0
    %vm2362 = vcmp.ge.f32.partialorder %v2298, 0.0
    %vm2363 = vcmp.ge.f32.partialorder %v2299, 0.0
    %vm2364 = vcmp.ge.f32.partialorder %v2300, 0.0
    %vm2365 = vcmp.ge.f32.partialorder %v2301, 0.0
    %vm2366 = vcmp.ge.f32.partialorder %v2302, 0.0
    %vm2367 = vcmp.ge.f32.partialorder %v2303, 0.0
    %vm2368 = vcmp.ge.f32.partialorder %v2304, 0.0
    %vm2369 = vcmp.ge.f32.partialorder %v2305, 0.0
    %vm2370 = vcmp.ge.f32.partialorder %v2306, 0.0
    %vm2371 = vcmp.ge.f32.partialorder %v2307, 0.0
    %vm2372 = vcmp.ge.f32.partialorder %v2308, 0.0
    %vm2373 = vcmp.ge.f32.partialorder %v2309, 0.0
    %vm2374 = vcmp.ge.f32.partialorder %v2310, 0.0
    %vm2375 = vcmp.ge.f32.partialorder %v2311, 0.0
    %vm2376 = vcmp.ge.f32.partialorder %v2312, 0.0
    %vm2377 = vcmp.ge.f32.partialorder %v2313, 0.0
    %vm2378 = vcmp.ge.f32.partialorder %v2314, 0.0
    %vm2379 = vcmp.ge.f32.partialorder %v2315, 0.0
    %vm2380 = vcmp.ge.f32.partialorder %v2316, 0.0
    %vm2381 = vcmp.ge.f32.partialorder %v2317, 0.0
    %vm2382 = vcmp.ge.f32.partialorder %v2318, 0.0
    %vm2383 = vcmp.ge.f32.partialorder %v2319, 0.0
    %vm2384 = vcmp.ge.f32.partialorder %v2320, 0.0
    %vm2385 = vcmp.ge.f32.partialorder %v2321, 0.0
    %vm2386 = vcmp.ge.f32.partialorder %v2322, 0.0
    %vm2387 = vcmp.ge.f32.partialorder %v2323, 0.0
    %vm2388 = vcmp.ge.f32.partialorder %v2324, 0.0
    %vm2389 = vcmp.ge.f32.partialorder %v2325, 0.0
    %vm2390 = vcmp.ge.f32.partialorder %v2326, 0.0
    %vm2391 = vcmp.ge.f32.partialorder %v2327, 0.0
    %vm2392 = vcmp.ge.f32.partialorder %v2328, 0.0
    %vm2393 = vcmp.ge.f32.partialorder %v2329, 0.0
    %vm2394 = vcmp.ge.f32.partialorder %v2330, 0.0
    %vm2395 = vcmp.ge.f32.partialorder %v2331, 0.0
    %vm2396 = vcmp.ge.f32.partialorder %v2332, 0.0
    %vm2397 = vcmp.ge.f32.partialorder %v2333, 0.0
    %vm2398 = vcmp.ge.f32.partialorder %v2334, 0.0
    %vm2399 = vcmp.ge.f32.partialorder %v2335, 0.0
    %vm2400 = vcmp.ge.f32.partialorder %v2336, 0.0
    %vm2401 = vcmp.ge.f32.partialorder %v2337, 0.0
    %vm2402 = vcmp.ge.f32.partialorder %v2338, 0.0
    %vm2403 = vcmp.ge.f32.partialorder %v2339, 0.0
    %vm2404 = vcmp.ge.f32.partialorder %v2340, 0.0
    %vm2405 = vcmp.ge.f32.partialorder %v2341, 0.0
    %vm2406 = vcmp.ge.f32.partialorder %v2342, 0.0
    %v2407 = vld [vmem:[%s2 + $0x3] sm:$0x1]
    %v2408 = vlaneseq
    %v2409 = vshrl.u32 %v2408, 7
    %v2410 = vsub.s32 0, %v2409
    %v2411 = vrot.slane %v2407, %v2410
    %v2412 = vmul.f32 %v2411, %v2279
    %v2413 = vmul.f32 %v2411, %v2280
    %v2414 = vmul.f32 %v2411, %v2281
    %v2415 = vmul.f32 %v2411, %v2282
    %v2416 = vmul.f32 %v2411, %v2283
    %v2417 = vmul.f32 %v2411, %v2284
    %v2418 = vmul.f32 %v2411, %v2285
    %v2419 = vmul.f32 %v2411, %v2286
    %v2420 = vmul.f32 %v2411, %v2287
    %v2421 = vmul.f32 %v2411, %v2288
    %v2422 = vmul.f32 %v2411, %v2289
    %v2423 = vmul.f32 %v2411, %v2290
    %v2424 = vmul.f32 %v2411, %v2291
    %v2425 = vmul.f32 %v2411, %v2292
    %v2426 = vmul.f32 %v2411, %v2293
    %v2427 = vmul.f32 %v2411, %v2294
    %v2428 = vmul.f32 %v2411, %v2295
    %v2429 = vmul.f32 %v2411, %v2296
    %v2430 = vmul.f32 %v2411, %v2297
    %v2431 = vmul.f32 %v2411, %v2298
    %v2432 = vmul.f32 %v2411, %v2299
    %v2433 = vmul.f32 %v2411, %v2300
    %v2434 = vmul.f32 %v2411, %v2301
    %v2435 = vmul.f32 %v2411, %v2302
    %v2436 = vmul.f32 %v2411, %v2303
    %v2437 = vmul.f32 %v2411, %v2304
    %v2438 = vmul.f32 %v2411, %v2305
    %v2439 = vmul.f32 %v2411, %v2306
    %v2440 = vmul.f32 %v2411, %v2307
    %v2441 = vmul.f32 %v2411, %v2308
    %v2442 = vmul.f32 %v2411, %v2309
    %v2443 = vmul.f32 %v2411, %v2310
    %v2444 = vmul.f32 %v2411, %v2311
    %v2445 = vmul.f32 %v2411, %v2312
    %v2446 = vmul.f32 %v2411, %v2313
    %v2447 = vmul.f32 %v2411, %v2314
    %v2448 = vmul.f32 %v2411, %v2315
    %v2449 = vmul.f32 %v2411, %v2316
    %v2450 = vmul.f32 %v2411, %v2317
    %v2451 = vmul.f32 %v2411, %v2318
    %v2452 = vmul.f32 %v2411, %v2319
    %v2453 = vmul.f32 %v2411, %v2320
    %v2454 = vmul.f32 %v2411, %v2321
    %v2455 = vmul.f32 %v2411, %v2322
    %v2456 = vmul.f32 %v2411, %v2323
    %v2457 = vmul.f32 %v2411, %v2324
    %v2458 = vmul.f32 %v2411, %v2325
    %v2459 = vmul.f32 %v2411, %v2326
    %v2460 = vmul.f32 %v2411, %v2327
    %v2461 = vmul.f32 %v2411, %v2328
    %v2462 = vmul.f32 %v2411, %v2329
    %v2463 = vmul.f32 %v2411, %v2330
    %v2464 = vmul.f32 %v2411, %v2331
    %v2465 = vmul.f32 %v2411, %v2332
    %v2466 = vmul.f32 %v2411, %v2333
    %v2467 = vmul.f32 %v2411, %v2334
    %v2468 = vmul.f32 %v2411, %v2335
    %v2469 = vmul.f32 %v2411, %v2336
    %v2470 = vmul.f32 %v2411, %v2337
    %v2471 = vmul.f32 %v2411, %v2338
    %v2472 = vmul.f32 %v2411, %v2339
    %v2473 = vmul.f32 %v2411, %v2340
    %v2474 = vmul.f32 %v2411, %v2341
    %v2475 = vmul.f32 %v2411, %v2342
    %v2476 = vsel %vm2343, %v2279, %v2412
    %v2477 = vsel %vm2344, %v2280, %v2413
    %v2478 = vsel %vm2345, %v2281, %v2414
    %v2479 = vsel %vm2346, %v2282, %v2415
    %v2480 = vsel %vm2347, %v2283, %v2416
    %v2481 = vsel %vm2348, %v2284, %v2417
    %v2482 = vsel %vm2349, %v2285, %v2418
    %v2483 = vsel %vm2350, %v2286, %v2419
    %v2484 = vsel %vm2351, %v2287, %v2420
    %v2485 = vsel %vm2352, %v2288, %v2421
    %v2486 = vsel %vm2353, %v2289, %v2422
    %v2487 = vsel %vm2354, %v2290, %v2423
    %v2488 = vsel %vm2355, %v2291, %v2424
    %v2489 = vsel %vm2356, %v2292, %v2425
    %v2490 = vsel %vm2357, %v2293, %v2426
    %v2491 = vsel %vm2358, %v2294, %v2427
    %v2492 = vsel %vm2359, %v2295, %v2428
    %v2493 = vsel %vm2360, %v2296, %v2429
    %v2494 = vsel %vm2361, %v2297, %v2430
    %v2495 = vsel %vm2362, %v2298, %v2431
    %v2496 = vsel %vm2363, %v2299, %v2432
    %v2497 = vsel %vm2364, %v2300, %v2433
    %v2498 = vsel %vm2365, %v2301, %v2434
    %v2499 = vsel %vm2366, %v2302, %v2435
    %v2500 = vsel %vm2367, %v2303, %v2436
    %v2501 = vsel %vm2368, %v2304, %v2437
    %v2502 = vsel %vm2369, %v2305, %v2438
    %v2503 = vsel %vm2370, %v2306, %v2439
    %v2504 = vsel %vm2371, %v2307, %v2440
    %v2505 = vsel %vm2372, %v2308, %v2441
    %v2506 = vsel %vm2373, %v2309, %v2442
    %v2507 = vsel %vm2374, %v2310, %v2443
    %v2508 = vsel %vm2375, %v2311, %v2444
    %v2509 = vsel %vm2376, %v2312, %v2445
    %v2510 = vsel %vm2377, %v2313, %v2446
    %v2511 = vsel %vm2378, %v2314, %v2447
    %v2512 = vsel %vm2379, %v2315, %v2448
    %v2513 = vsel %vm2380, %v2316, %v2449
    %v2514 = vsel %vm2381, %v2317, %v2450
    %v2515 = vsel %vm2382, %v2318, %v2451
    %v2516 = vsel %vm2383, %v2319, %v2452
    %v2517 = vsel %vm2384, %v2320, %v2453
    %v2518 = vsel %vm2385, %v2321, %v2454
    %v2519 = vsel %vm2386, %v2322, %v2455
    %v2520 = vsel %vm2387, %v2323, %v2456
    %v2521 = vsel %vm2388, %v2324, %v2457
    %v2522 = vsel %vm2389, %v2325, %v2458
    %v2523 = vsel %vm2390, %v2326, %v2459
    %v2524 = vsel %vm2391, %v2327, %v2460
    %v2525 = vsel %vm2392, %v2328, %v2461
    %v2526 = vsel %vm2393, %v2329, %v2462
    %v2527 = vsel %vm2394, %v2330, %v2463
    %v2528 = vsel %vm2395, %v2331, %v2464
    %v2529 = vsel %vm2396, %v2332, %v2465
    %v2530 = vsel %vm2397, %v2333, %v2466
    %v2531 = vsel %vm2398, %v2334, %v2467
    %v2532 = vsel %vm2399, %v2335, %v2468
    %v2533 = vsel %vm2400, %v2336, %v2469
    %v2534 = vsel %vm2401, %v2337, %v2470
    %v2535 = vsel %vm2402, %v2338, %v2471
    %v2536 = vsel %vm2403, %v2339, %v2472
    %v2537 = vsel %vm2404, %v2340, %v2473
    %v2538 = vsel %vm2405, %v2341, %v2474
    %v2539 = vsel %vm2406, %v2342, %v2475
    %v2540 = vld [vmem:[%s2 + $0x4] sm:$0x1]
    %v2541 = vlaneseq
    %v2542 = vshrl.u32 %v2541, 7
    %v2543 = vsub.s32 0, %v2542
    %v2544 = vrot.slane %v2540, %v2543
    %v2545 = vadd.f32 %v2476, %v2544
    %v2546 = vadd.f32 %v2477, %v2544
    %v2547 = vadd.f32 %v2478, %v2544
    %v2548 = vadd.f32 %v2479, %v2544
    %v2549 = vadd.f32 %v2480, %v2544
    %v2550 = vadd.f32 %v2481, %v2544
    %v2551 = vadd.f32 %v2482, %v2544
    %v2552 = vadd.f32 %v2483, %v2544
    %v2553 = vadd.f32 %v2484, %v2544
    %v2554 = vadd.f32 %v2485, %v2544
    %v2555 = vadd.f32 %v2486, %v2544
    %v2556 = vadd.f32 %v2487, %v2544
    %v2557 = vadd.f32 %v2488, %v2544
    %v2558 = vadd.f32 %v2489, %v2544
    %v2559 = vadd.f32 %v2490, %v2544
    %v2560 = vadd.f32 %v2491, %v2544
    %v2561 = vadd.f32 %v2492, %v2544
    %v2562 = vadd.f32 %v2493, %v2544
    %v2563 = vadd.f32 %v2494, %v2544
    %v2564 = vadd.f32 %v2495, %v2544
    %v2565 = vadd.f32 %v2496, %v2544
    %v2566 = vadd.f32 %v2497, %v2544
    %v2567 = vadd.f32 %v2498, %v2544
    %v2568 = vadd.f32 %v2499, %v2544
    %v2569 = vadd.f32 %v2500, %v2544
    %v2570 = vadd.f32 %v2501, %v2544
    %v2571 = vadd.f32 %v2502, %v2544
    %v2572 = vadd.f32 %v2503, %v2544
    %v2573 = vadd.f32 %v2504, %v2544
    %v2574 = vadd.f32 %v2505, %v2544
    %v2575 = vadd.f32 %v2506, %v2544
    %v2576 = vadd.f32 %v2507, %v2544
    %v2577 = vadd.f32 %v2508, %v2544
    %v2578 = vadd.f32 %v2509, %v2544
    %v2579 = vadd.f32 %v2510, %v2544
    %v2580 = vadd.f32 %v2511, %v2544
    %v2581 = vadd.f32 %v2512, %v2544
    %v2582 = vadd.f32 %v2513, %v2544
    %v2583 = vadd.f32 %v2514, %v2544
    %v2584 = vadd.f32 %v2515, %v2544
    %v2585 = vadd.f32 %v2516, %v2544
    %v2586 = vadd.f32 %v2517, %v2544
    %v2587 = vadd.f32 %v2518, %v2544
    %v2588 = vadd.f32 %v2519, %v2544
    %v2589 = vadd.f32 %v2520, %v2544
    %v2590 = vadd.f32 %v2521, %v2544
    %v2591 = vadd.f32 %v2522, %v2544
    %v2592 = vadd.f32 %v2523, %v2544
    %v2593 = vadd.f32 %v2524, %v2544
    %v2594 = vadd.f32 %v2525, %v2544
    %v2595 = vadd.f32 %v2526, %v2544
    %v2596 = vadd.f32 %v2527, %v2544
    %v2597 = vadd.f32 %v2528, %v2544
    %v2598 = vadd.f32 %v2529, %v2544
    %v2599 = vadd.f32 %v2530, %v2544
    %v2600 = vadd.f32 %v2531, %v2544
    %v2601 = vadd.f32 %v2532, %v2544
    %v2602 = vadd.f32 %v2533, %v2544
    %v2603 = vadd.f32 %v2534, %v2544
    %v2604 = vadd.f32 %v2535, %v2544
    %v2605 = vadd.f32 %v2536, %v2544
    %v2606 = vadd.f32 %v2537, %v2544
    %v2607 = vadd.f32 %v2538, %v2544
    %v2608 = vadd.f32 %v2539, %v2544
    %2609 = vst [vmem:[#allocation2] sm:$0xff] %v2545
    %2610 = vst [vmem:[#allocation2 + $0x8] sm:$0xff] %v2546
    %2611 = vst [vmem:[#allocation2 + $0x10] sm:$0xff] %v2547
    %2612 = vst [vmem:[#allocation2 + $0x18] sm:$0xff] %v2548
    %2613 = vst [vmem:[#allocation2 + $0x20] sm:$0xff] %v2549
    %2614 = vst [vmem:[#allocation2 + $0x28] sm:$0xff] %v2550
    %2615 = vst [vmem:[#allocation2 + $0x30] sm:$0xff] %v2551
    %2616 = vst [vmem:[#allocation2 + $0x38] sm:$0xff] %v2552
    %2617 = vst [vmem:[#allocation2 + $0x40] sm:$0xff] %v2553
    %2618 = vst [vmem:[#allocation2 + $0x48] sm:$0xff] %v2554
    %2619 = vst [vmem:[#allocation2 + $0x50] sm:$0xff] %v2555
    %2620 = vst [vmem:[#allocation2 + $0x58] sm:$0xff] %v2556
    %2621 = vst [vmem:[#allocation2 + $0x60] sm:$0xff] %v2557
    %2622 = vst [vmem:[#allocation2 + $0x68] sm:$0xff] %v2558
    %2623 = vst [vmem:[#allocation2 + $0x70] sm:$0xff] %v2559
    %2624 = vst [vmem:[#allocation2 + $0x78] sm:$0xff] %v2560
    %2625 = vst [vmem:[#allocation2 + $0x80] sm:$0xff] %v2561
    %2626 = vst [vmem:[#allocation2 + $0x88] sm:$0xff] %v2562
    %2627 = vst [vmem:[#allocation2 + $0x90] sm:$0xff] %v2563
    %2628 = vst [vmem:[#allocation2 + $0x98] sm:$0xff] %v2564
    %2629 = vst [vmem:[#allocation2 + $0xa0] sm:$0xff] %v2565
    %2630 = vst [vmem:[#allocation2 + $0xa8] sm:$0xff] %v2566
    %2631 = vst [vmem:[#allocation2 + $0xb0] sm:$0xff] %v2567
    %2632 = vst [vmem:[#allocation2 + $0xb8] sm:$0xff] %v2568
    %2633 = vst [vmem:[#allocation2 + $0xc0] sm:$0xff] %v2569
    %2634 = vst [vmem:[#allocation2 + $0xc8] sm:$0xff] %v2570
    %2635 = vst [vmem:[#allocation2 + $0xd0] sm:$0xff] %v2571
    %2636 = vst [vmem:[#allocation2 + $0xd8] sm:$0xff] %v2572
    %2637 = vst [vmem:[#allocation2 + $0xe0] sm:$0xff] %v2573
    %2638 = vst [vmem:[#allocation2 + $0xe8] sm:$0xff] %v2574
    %2639 = vst [vmem:[#allocation2 + $0xf0] sm:$0xff] %v2575
    %2640 = vst [vmem:[#allocation2 + $0xf8] sm:$0xff] %v2576
    %2641 = vst [vmem:[#allocation2 + $0x100] sm:$0xff] %v2577
    %2642 = vst [vmem:[#allocation2 + $0x108] sm:$0xff] %v2578
    %2643 = vst [vmem:[#allocation2 + $0x110] sm:$0xff] %v2579
    %2644 = vst [vmem:[#allocation2 + $0x118] sm:$0xff] %v2580
    %2645 = vst [vmem:[#allocation2 + $0x120] sm:$0xff] %v2581
    %2646 = vst [vmem:[#allocation2 + $0x128] sm:$0xff] %v2582
    %2647 = vst [vmem:[#allocation2 + $0x130] sm:$0xff] %v2583
    %2648 = vst [vmem:[#allocation2 + $0x138] sm:$0xff] %v2584
    %2649 = vst [vmem:[#allocation2 + $0x140] sm:$0xff] %v2585
    %2650 = vst [vmem:[#allocation2 + $0x148] sm:$0xff] %v2586
    %2651 = vst [vmem:[#allocation2 + $0x150] sm:$0xff] %v2587
    %2652 = vst [vmem:[#allocation2 + $0x158] sm:$0xff] %v2588
    %2653 = vst [vmem:[#allocation2 + $0x160] sm:$0xff] %v2589
    %2654 = vst [vmem:[#allocation2 + $0x168] sm:$0xff] %v2590
    %2655 = vst [vmem:[#allocation2 + $0x170] sm:$0xff] %v2591
    %2656 = vst [vmem:[#allocation2 + $0x178] sm:$0xff] %v2592
    %2657 = vst [vmem:[#allocation2 + $0x180] sm:$0xff] %v2593
    %2658 = vst [vmem:[#allocation2 + $0x188] sm:$0xff] %v2594
    %2659 = vst [vmem:[#allocation2 + $0x190] sm:$0xff] %v2595
    %2660 = vst [vmem:[#allocation2 + $0x198] sm:$0xff] %v2596
    %2661 = vst [vmem:[#allocation2 + $0x1a0] sm:$0xff] %v2597
    %2662 = vst [vmem:[#allocation2 + $0x1a8] sm:$0xff] %v2598
    %2663 = vst [vmem:[#allocation2 + $0x1b0] sm:$0xff] %v2599
    %2664 = vst [vmem:[#allocation2 + $0x1b8] sm:$0xff] %v2600
    %2665 = vst [vmem:[#allocation2 + $0x1c0] sm:$0xff] %v2601
    %2666 = vst [vmem:[#allocation2 + $0x1c8] sm:$0xff] %v2602
    %2667 = vst [vmem:[#allocation2 + $0x1d0] sm:$0xff] %v2603
    %2668 = vst [vmem:[#allocation2 + $0x1d8] sm:$0xff] %v2604
    %2669 = vst [vmem:[#allocation2 + $0x1e0] sm:$0xff] %v2605
    %2670 = vst [vmem:[#allocation2 + $0x1e8] sm:$0xff] %v2606
    %2671 = vst [vmem:[#allocation2 + $0x1f0] sm:$0xff] %v2607
    %2672 = vst [vmem:[#allocation2 + $0x1f8] sm:$0xff] %v2608
    // Predicated region
    $region14: #{vit_intermediate.1} parent=1 // pred_check
      _
    $region15: #{vit_intermediate.1} parent=1 // pred_check_branch
      %2674 = sbr.rel (0) target = $region17
    $region16: #{vit_intermediate.1} parent=1 // pred_region
      %s2676 = ssub.s32 8192, 8192
      %2677 = vsyncadd [#allocation3], %s2676
      %s2678 = sshll.u32 [#allocation2], 4
      %s2679 = int_to_ptr.vmem [resolvable:$true] %s2678
      %2684 = dma.vmem_to_hbm [thread:$0]  %s2679, 8192, %s3, [#allocation3], 128, 128, 8
    $region17: #{vit_intermediate.1} parent=1 // pred_fallthru
      _
    // Predicated region
    $region18: #{vit_intermediate.1} parent=1 // pred_check
      _
    $region19: #{vit_intermediate.1} parent=1 // pred_check_branch
      %2686 = sbr.rel (0) target = $region21
    $region20: #{vit_intermediate.1} parent=1 // pred_region
      %2687 = dma.done [#allocation3], 8192
    $region21: #{vit_intermediate.1} parent=1 // pred_fallthru
      _
    %2688 = vsyncpa [#allocation3], 1

</llo_original>
